<compile_context>
chip_gen: v6e
topology: v6e:2x2x1
jax: 0.10.0
libtpu: 0.0.40
codegen_flags: <defaults>
</compile_context>

<pallas_src>
import functools

import jax
import jax.numpy as jnp
from jax import lax
from jax.experimental import pallas as pl
from jax.experimental.pallas import tpu as pltpu

_EPS = 1e-6                      # torch F.pairwise_distance eps (added to the diff)
_MIN_PALLAS_BYTES = 256 * 1024   # below this, plain jnp beats kernel dispatch
_MAX_BLOCK_ROWS = 1024
_CORE_SHARDS = 2                 # grid shards on the "parallel" axis (v7x has 2 TCs;
                                 # at most one extra masked step on 1-TC chips)


def _round_up(x, m):
    return ((x + m - 1) // m) * m


def _sublane_granularity(itemsize):
    # f32 -> 8 rows, bf16/f16 -> 16, int8/fp8 -> 32 (packed-dtype sublane tiling).
    return 8 * max(1, 4 // max(1, itemsize))


def _vmem_input_budget():
    """(budget_bytes for double-buffered input tiles, physical VMEM bytes)."""
    cap = None
    try:
        cap = int(getattr(pltpu.get_tpu_info(), "vmem_capacity_bytes"))
    except Exception:
        cap = None
    if not cap:
        cap = 64 << 20           # conservative: v7x per-TensorCore VMEM
    budget = max(8 << 20, min(cap // 3, 32 << 20))
    return budget, cap


def _pick_block_rows(batch, dim, itemsize, n_inputs, budget):
    gran = _sublane_granularity(itemsize)
    per_row = 2 * n_inputs * dim * itemsize          # double-buffered input bytes / row
    cap_rows = max(gran, (budget // max(per_row, 1)) // gran * gran)
    tb = min(_MAX_BLOCK_ROWS, cap_rows, _round_up(batch, gran))
    return max(gran, (tb // gran) * gran)


def _branch_sums(a_ref, p_ref, n_ref, valid, margin):
    """Per-tile (sum of positive triplet losses, hard-triplet count), each (1, 1) f32."""
    a = a_ref[...].astype(jnp.float32)
    p = p_ref[...].astype(jnp.float32)
    n = n_ref[...].astype(jnp.float32)
    dp = a - p + _EPS
    dn = a - n + _EPS
    pos = jnp.sqrt(jnp.sum(dp * dp, axis=1, keepdims=True))   # (TB, 1)
    neg = jnp.sqrt(jnp.sum(dn * dn, axis=1, keepdims=True))   # (TB, 1)
    loss = jnp.maximum(pos - neg + margin, 0.0)
    if valid is not None:
        loss = jnp.where(valid, loss, 0.0)                     # mask BEFORE the > 0 compare
    hard = (loss > 0.0).astype(jnp.float32)
    return (jnp.sum(loss, keepdims=True),                      # (1, 1)
            jnp.sum(hard, keepdims=True))                      # (1, 1)


def _sums_kernel(*refs, batch, block_rows, steps_per_shard, margin,
                 need_mask, n_branches):
    out_ref = refs[-1]
    in_refs = refs[:-1]
    step = pl.program_id(1)

    @pl.when(step == 0)
    def _():
        out_ref[...] = jnp.zeros_like(out_ref)

    tile = pl.program_id(0) * steps_per_shard + step
    if need_mask:
        row = tile * block_rows + lax.broadcasted_iota(jnp.int32, (block_rows, 1), 0)
        valid = row < batch
    else:
        valid = None

    nq = 2 * n_branches
    sub = lax.broadcasted_iota(jnp.int32, (1, nq, 128), 1)
    acc = jnp.zeros((1, nq, 128), jnp.float32)
    for b in range(n_branches):
        s, cnt = _branch_sums(*in_refs[3 * b:3 * b + 3], valid, margin)
        acc = acc + jnp.where(sub == 2 * b, s, 0.0) \
                  + jnp.where(sub == 2 * b + 1, cnt, 0.0)
    out_ref[...] += acc            # single lane-dense full-block RMW per step


def _run_sums_kernel(args, *, margin, block_rows):
    """Run the sharded accumulation kernel; returns a flat (2*branches,) f32 array
    laid out as [sa_sum, sa_cnt(, gl_sum, gl_cnt)]."""
    batch, dim = args[0].shape
    n_inputs = len(args)
    n_branches = n_inputs // 3
    nq = 2 * n_branches
    itemsize = jnp.dtype(args[0].dtype).itemsize

    num_tiles = -(-batch // block_rows)
    num_shards = max(1, min(_CORE_SHARDS, num_tiles))
    steps_per_shard = -(-num_tiles // num_shards)
    last_tile = num_tiles - 1
    # Mask is only needed when the last tile is ragged or when shards overrun
    # the tile grid (clamped, re-read tiles).  Trace-time decision.
    need_mask = (batch % block_rows != 0) or (num_shards * steps_per_shard != num_tiles)

    def in_map(c, i):
        t = c * steps_per_shard + i
        return (jnp.minimum(t, last_tile), 0)    # clamp keeps DMA in-bounds; mask kills it

    in_spec = pl.BlockSpec((block_rows, dim), in_map)
    out_spec = pl.BlockSpec((1, nq, 128), lambda c, i: (c, 0, 0))  # per-shard accumulator

    _, vmem_cap = _vmem_input_budget()
    needed = 2 * n_inputs * block_rows * dim * itemsize            # double-buffered tiles
    vmem_limit = max(16 << 20, needed + (8 << 20))
    vmem_limit = int(min(vmem_limit, max(vmem_cap - (8 << 20), needed + (2 << 20))))

    sums = pl.pallas_call(
        functools.partial(_sums_kernel, batch=batch, block_rows=block_rows,
                          steps_per_shard=steps_per_shard, margin=margin,
                          need_mask=need_mask, n_branches=n_branches),
        out_shape=jax.ShapeDtypeStruct((num_shards, nq, 128), jnp.float32),
        grid=(num_shards, steps_per_shard),
        in_specs=[in_spec] * n_inputs,
        out_specs=out_spec,
        compiler_params=pltpu.CompilerParams(
            dimension_semantics=("parallel", "arbitrary"),
            vmem_limit_bytes=vmem_limit),
    )(*args)
    return jnp.sum(sums, axis=0)[:, 0]           # (nq,)


def _triplet_hard_mean_jnp(a, p, n, margin):
    """Pure-jnp fallback / reference: triplet loss with hard mining."""
    a = a.astype(jnp.float32)
    p = p.astype(jnp.float32)
    n = n.astype(jnp.float32)
    pos = jnp.sqrt(jnp.sum((a - p + _EPS) ** 2, axis=1))
    neg = jnp.sqrt(jnp.sum((a - n + _EPS) ** 2, axis=1))
    loss = jnp.maximum(pos - neg + margin, 0.0)
    cnt = jnp.sum((loss > 0.0).astype(jnp.float32))
    return jnp.where(cnt > 0.0, jnp.sum(loss) / jnp.maximum(cnt, 1.0), 0.0)


def combined_loss(sa_anchor, sa_positive, sa_negative,
                  glca_anchor=None, glca_positive=None, glca_negative=None,
                  *, log_vars=None, triplet_margin=0.3,
                  use_dynamic_weights=True, alpha=0.5,
                  block_rows=None, min_pallas_bytes=_MIN_PALLAS_BYTES):
    """JAX/Pallas equivalent of CombinedLoss.forward -> (total_loss, loss_dict).

    Pass embeddings in their native (preferably bf16) dtype; the kernel casts to
    f32 after load.  loss_dict holds JAX scalars (no host syncs).
    """
    margin = float(triplet_margin)
    has_glca = glca_anchor is not None
    batch, dim = sa_anchor.shape
    itemsize = jnp.dtype(sa_anchor.dtype).itemsize
    n_inputs = 6 if has_glca else 3
    total_bytes = n_inputs * batch * dim * itemsize

    if total_bytes >= min_pallas_bytes:
        budget, _ = _vmem_input_budget()
        gran = _sublane_granularity(itemsize)
        if block_rows is None:
            block_rows = _pick_block_rows(batch, dim, itemsize, n_inputs, budget)
        else:
            block_rows = max(gran, _round_up(int(block_rows), gran))

        if has_glca:
            args = (sa_anchor, sa_positive, sa_negative,
                    glca_anchor, glca_positive, glca_negative)
        else:
            args = (sa_anchor, sa_positive, sa_negative)

        sums = _run_sums_kernel(args, margin=margin, block_rows=block_rows)
        sa_loss = jnp.where(sums[1] > 0.0, sums[0] / jnp.maximum(sums[1], 1.0), 0.0)
        gl_loss = (jnp.where(sums[3] > 0.0, sums[2] / jnp.maximum(sums[3], 1.0), 0.0)
                   if has_glca else None)
    else:
        # Tiny inputs: pallas_call dispatch overhead dominates -> plain jnp.
        sa_loss = _triplet_hard_mean_jnp(sa_anchor, sa_positive, sa_negative, margin)
        gl_loss = (_triplet_hard_mean_jnp(glca_anchor, glca_positive, glca_negative, margin)
                   if has_glca else None)

    if not has_glca:
        total = sa_loss
        return total, {"sa_loss": sa_loss, "sa_weight": 1.0, "total_loss": total}

    loss_dict = {"sa_loss": sa_loss, "glca_loss": gl_loss}
    if use_dynamic_weights:
        if log_vars is None:
            log_vars = jnp.zeros((2,), jnp.float32)   # nn.Parameter(torch.zeros(2)) init
        log_vars = log_vars.astype(jnp.float32)
        w1 = jnp.exp(-log_vars[0])
        w2 = jnp.exp(-log_vars[1])
        total = w1 * sa_loss + log_vars[0] + w2 * gl_loss + log_vars[1]
        loss_dict["sa_weight"] = w1
        loss_dict["glca_weight"] = w2
    else:
        a = float(alpha)
        total = a * sa_loss + (1.0 - a) * gl_loss
        loss_dict["sa_weight"] = a
        loss_dict["glca_weight"] = 1.0 - a
    loss_dict["total_loss"] = total
    return total, loss_dict


def _reference_losses(sa_a, sa_p, sa_n, gl_a=None, gl_p=None, gl_n=None,
                      log_vars=None, margin=0.3, use_dynamic_weights=True, alpha=0.5):
    """Pure-JAX reference mirroring the PyTorch module (for validation)."""
    sa = _triplet_hard_mean_jnp(sa_a, sa_p, sa_n, margin)
    if gl_a is None:
        return sa, None, sa
    gl = _triplet_hard_mean_jnp(gl_a, gl_p, gl_n, margin)
    if use_dynamic_weights:
        total = (jnp.exp(-log_vars[0]) * sa + log_vars[0]
                 + jnp.exp(-log_vars[1]) * gl + log_vars[1])
    else:
        total = alpha * sa + (1.0 - alpha) * gl
    return sa, gl, total


if __name__ == "__main__":
    # Full arrays at B=256 (exactly 4 tiles of 64 -> exercises the no-mask,
    # shard-balanced path); sliced to B=200 for the remainder-masking path.
    B_FULL, B, D = 256, 200, 256
    key = jax.random.PRNGKey(0)
    ks = jax.random.split(key, 6)
    sa_a_f = jax.random.normal(ks[0], (B_FULL, D), jnp.float32)
    sa_p_f = jax.random.normal(ks[1], (B_FULL, D), jnp.float32)
    sa_n_f = jax.random.normal(ks[2], (B_FULL, D), jnp.float32)
    gl_a_f = jax.random.normal(ks[3], (B_FULL, D), jnp.float32)
    gl_p_f = jax.random.normal(ks[4], (B_FULL, D), jnp.float32)
    gl_n_f = jax.random.normal(ks[5], (B_FULL, D), jnp.float32)
    sa_a, sa_p, sa_n = sa_a_f[:B], sa_p_f[:B], sa_n_f[:B]
    gl_a, gl_p, gl_n = gl_a_f[:B], gl_p_f[:B], gl_n_f[:B]
    log_vars = jnp.array([0.2, -0.3], jnp.float32)

    # --- dual-branch Pallas path, ragged batch (mask path, 2x2 grid) ---
    total, ld = combined_loss(sa_a, sa_p, sa_n, gl_a, gl_p, gl_n,
                              log_vars=log_vars, triplet_margin=0.3,
                              use_dynamic_weights=True, block_rows=64)
    total = jax.block_until_ready(total)
    ref_sa, ref_gl, ref_total = _reference_losses(
        sa_a, sa_p, sa_n, gl_a, gl_p, gl_n, log_vars=log_vars, margin=0.3)
    assert jnp.allclose(total, ref_total, atol=2e-5, rtol=1e-4), (total, ref_total)
    assert jnp.allclose(ld["sa_loss"], ref_sa, atol=2e-5, rtol=1e-4)
    assert jnp.allclose(ld["glca_loss"], ref_gl, atol=2e-5, rtol=1e-4)

    # --- dual-branch, even batch (no-mask fast path, 2 shards x 2 steps) ---
    total_ev, _ = combined_loss(sa_a_f, sa_p_f, sa_n_f, gl_a_f, gl_p_f, gl_n_f,
                                log_vars=log_vars, triplet_margin=0.3,
                                use_dynamic_weights=True, block_rows=64)
    total_ev = jax.block_until_ready(total_ev)
    _, _, ref_ev = _reference_losses(sa_a_f, sa_p_f, sa_n_f, gl_a_f, gl_p_f, gl_n_f,
                                     log_vars=log_vars, margin=0.3)
    assert jnp.allclose(total_ev, ref_ev, atol=2e-5, rtol=1e-4), (total_ev, ref_ev)

    # --- dual-branch, auto-picked block_rows (single tile, single shard) ---
    total_auto, _ = combined_loss(sa_a_f, sa_p_f, sa_n_f, gl_a_f, gl_p_f, gl_n_f,
                                  log_vars=log_vars, triplet_margin=0.3,
                                  use_dynamic_weights=True)
    total_auto = jax.block_until_ready(total_auto)
    assert jnp.allclose(total_auto, ref_ev, atol=2e-5, rtol=1e-4), (total_auto, ref_ev)

    # --- dual-branch, native bf16 inputs (cast happens in-kernel) ---
    bf = jnp.bfloat16
    total_bf, _ = combined_loss(sa_a.astype(bf), sa_p.astype(bf), sa_n.astype(bf),
                                gl_a.astype(bf), gl_p.astype(bf), gl_n.astype(bf),
                                log_vars=log_vars, triplet_margin=0.3,
                                use_dynamic_weights=True, block_rows=64)
    total_bf = jax.block_until_ready(total_bf)
    _, _, ref_total_bf = _reference_losses(
        sa_a.astype(bf), sa_p.astype(bf), sa_n.astype(bf),
        gl_a.astype(bf), gl_p.astype(bf), gl_n.astype(bf),
        log_vars=log_vars, margin=0.3)
    assert jnp.allclose(total_bf, ref_total_bf, atol=2e-4, rtol=1e-3), (total_bf, ref_total_bf)

    # --- SA-only Pallas path ---
    sa_total, sa_dict = combined_loss(sa_a, sa_p, sa_n, triplet_margin=0.3, block_rows=64)
    sa_total = jax.block_until_ready(sa_total)
    assert jnp.allclose(sa_total, ref_sa, atol=2e-5, rtol=1e-4), (sa_total, ref_sa)

    # --- tiny-input fallback path (pure jnp, no pallas dispatch) ---
    small_total, _ = combined_loss(sa_a[:8, :128], sa_p[:8, :128], sa_n[:8, :128],
                                   gl_a[:8, :128], gl_p[:8, :128], gl_n[:8, :128],
                                   log_vars=log_vars, triplet_margin=0.3)
    small_total = jax.block_until_ready(small_total)
    _, _, ref_small = _reference_losses(sa_a[:8, :128], sa_p[:8, :128], sa_n[:8, :128],
                                        gl_a[:8, :128], gl_p[:8, :128], gl_n[:8, :128],
                                        log_vars=log_vars, margin=0.3)
    assert jnp.allclose(small_total, ref_small, atol=1e-5, rtol=1e-5)

    print("KERNEL_OK")
</pallas_src>

<mosaic_0001>
module attributes {stable_mosaic.version = 11 : i64} {
  func.func @_sums_kernel(%arg0: i32, %arg1: i32, %arg2: memref<64x256xf32, #tpu.memory_space<vmem>>, %arg3: memref<64x256xf32, #tpu.memory_space<vmem>>, %arg4: memref<64x256xf32, #tpu.memory_space<vmem>>, %arg5: memref<64x256xf32, #tpu.memory_space<vmem>>, %arg6: memref<64x256xf32, #tpu.memory_space<vmem>>, %arg7: memref<64x256xf32, #tpu.memory_space<vmem>>, %arg8: memref<1x4x128xf32, #tpu.memory_space<vmem>>) attributes {dimension_semantics = [#tpu.dimension_semantics<parallel>, #tpu.dimension_semantics<arbitrary>], iteration_bounds = array<i64: 2, 2>, scalar_prefetch = 0 : i64, scratch_operands = 0 : i64, tpu.core_type = #tpu.core_type<tc>, window_params = [{transform_indices = @transform_0, window_bounds = array<i64: 64, 256>}, {transform_indices = @transform_1, window_bounds = array<i64: 64, 256>}, {transform_indices = @transform_2, window_bounds = array<i64: 64, 256>}, {transform_indices = @transform_3, window_bounds = array<i64: 64, 256>}, {transform_indices = @transform_4, window_bounds = array<i64: 64, 256>}, {transform_indices = @transform_5, window_bounds = array<i64: 64, 256>}, {transform_indices = @transform_6, window_bounds = array<i64: 1, 4, 128>}]} {
    %c0_i32 = arith.constant 0 : i32
    %0 = arith.cmpi eq, %arg1, %c0_i32 : i32
    %1 = arith.extui %0 : i1 to i32
    %c0_i32_0 = arith.constant 0 : i32
    %2 = arith.cmpi ne, %1, %c0_i32_0 : i32
    scf.if %2 {
      %cst_44 = arith.constant 0.000000e+00 : f32
      %120 = vector.broadcast %cst_44 : f32 to vector<1x4x128xf32>
      %c0_45 = arith.constant 0 : index
      %c0_46 = arith.constant 0 : index
      %c0_47 = arith.constant 0 : index
      %121 = vector.load %arg8[%c0_45, %c0_46, %c0_47] : memref<1x4x128xf32, #tpu.memory_space<vmem>>, vector<1x4x128xf32>
      tpu.vector_store %arg8[%c0_45, %c0_46, %c0_47], %120 {strides = array<i32>} : memref<1x4x128xf32, #tpu.memory_space<vmem>>, vector<1x4x128xf32>,
    } else {
    }
    %c2_i32 = arith.constant 2 : i32
    %3 = arith.muli %arg0, %c2_i32 : i32
    %4 = arith.addi %3, %arg1 : i32
    %c64_i32 = arith.constant 64 : i32
    %5 = arith.muli %4, %c64_i32 : i32
    %6 = tpu.iota {dimensions = array<i32: 0>} : vector<64x1xi32>
    %7 = vector.broadcast %5 : i32 to vector<64x1xi32>
    %8 = arith.addi %7, %6 : vector<64x1xi32>
    %c200_i32 = arith.constant 200 : i32
    %9 = vector.broadcast %c200_i32 : i32 to vector<64x1xi32>
    %10 = arith.cmpi slt, %8, %9 : vector<64x1xi32>
    %11 = tpu.iota {dimensions = array<i32: 1>} : vector<1x4x128xi32>
    %cst = arith.constant 0.000000e+00 : f32
    %12 = vector.broadcast %cst : f32 to vector<1x4x128xf32>
    %c0 = arith.constant 0 : index
    %c0_1 = arith.constant 0 : index
    %13 = vector.load %arg2[%c0, %c0_1] : memref<64x256xf32, #tpu.memory_space<vmem>>, vector<64x256xf32>
    %c0_2 = arith.constant 0 : index
    %c0_3 = arith.constant 0 : index
    %14 = vector.load %arg3[%c0_2, %c0_3] : memref<64x256xf32, #tpu.memory_space<vmem>>, vector<64x256xf32>
    %c0_4 = arith.constant 0 : index
    %c0_5 = arith.constant 0 : index
    %15 = vector.load %arg4[%c0_4, %c0_5] : memref<64x256xf32, #tpu.memory_space<vmem>>, vector<64x256xf32>
    %16 = arith.subf %13, %14 : vector<64x256xf32>
    %cst_6 = arith.constant 9.99999997E-7 : f32
    %17 = vector.broadcast %cst_6 : f32 to vector<64x256xf32>
    %18 = arith.addf %16, %17 : vector<64x256xf32>
    %19 = arith.subf %13, %15 : vector<64x256xf32>
    %cst_7 = arith.constant 9.99999997E-7 : f32
    %20 = vector.broadcast %cst_7 : f32 to vector<64x256xf32>
    %21 = arith.addf %19, %20 : vector<64x256xf32>
    %22 = arith.mulf %18, %18 : vector<64x256xf32>
    %cst_8 = arith.constant dense<0.000000e+00> : vector<64xf32>
    %23 = vector.multi_reduction <add>, %22, %cst_8 [1] : vector<64x256xf32> to vector<64xf32>
    %24 = vector.shape_cast %23 : vector<64xf32> to vector<64x1xf32>
    %25 = math.sqrt %24 : vector<64x1xf32>
    %26 = arith.mulf %21, %21 : vector<64x256xf32>
    %cst_9 = arith.constant dense<0.000000e+00> : vector<64xf32>
    %27 = vector.multi_reduction <add>, %26, %cst_9 [1] : vector<64x256xf32> to vector<64xf32>
    %28 = vector.shape_cast %27 : vector<64xf32> to vector<64x1xf32>
    %29 = math.sqrt %28 : vector<64x1xf32>
    %30 = arith.subf %25, %29 : vector<64x1xf32>
    %cst_10 = arith.constant 3.000000e-01 : f32
    %31 = vector.broadcast %cst_10 : f32 to vector<64x1xf32>
    %32 = arith.addf %30, %31 : vector<64x1xf32>
    %cst_11 = arith.constant 0.000000e+00 : f32
    %33 = vector.broadcast %cst_11 : f32 to vector<64x1xf32>
    %34 = arith.maximumf %32, %33 : vector<64x1xf32>
    %cst_12 = arith.constant 0.000000e+00 : f32
    %35 = vector.broadcast %cst_12 : f32 to vector<64x1xf32>
    %36 = arith.select %10, %34, %35 : vector<64x1xi1>, vector<64x1xf32>
    %cst_13 = arith.constant 0.000000e+00 : f32
    %37 = vector.broadcast %cst_13 : f32 to vector<64x1xf32>
    %38 = arith.cmpf ogt, %36, %37 : vector<64x1xf32>
    %39 = arith.extui %38 : vector<64x1xi1> to vector<64x1xi32>
    %40 = arith.sitofp %39 : vector<64x1xi32> to vector<64x1xf32>
    %41 = vector.shape_cast %36 : vector<64x1xf32> to vector<1x64x1xf32>
    %cst_14 = arith.constant dense<0.000000e+00> : vector<1xf32>
    %42 = vector.multi_reduction <add>, %41, %cst_14 [1, 2] : vector<1x64x1xf32> to vector<1xf32>
    %43 = vector.shape_cast %42 : vector<1xf32> to vector<1x1x1xf32>
    %44 = vector.extract %43[0, 0, 0] : f32 from vector<1x1x1xf32>
    %45 = vector.broadcast %44 : f32 to vector<1x1xf32>
    %46 = vector.shape_cast %40 : vector<64x1xf32> to vector<1x64x1xf32>
    %cst_15 = arith.constant dense<0.000000e+00> : vector<1xf32>
    %47 = vector.multi_reduction <add>, %46, %cst_15 [1, 2] : vector<1x64x1xf32> to vector<1xf32>
    %48 = vector.shape_cast %47 : vector<1xf32> to vector<1x1x1xf32>
    %49 = vector.extract %48[0, 0, 0] : f32 from vector<1x1x1xf32>
    %50 = vector.broadcast %49 : f32 to vector<1x1xf32>
    %c0_i32_16 = arith.constant 0 : i32
    %51 = vector.broadcast %c0_i32_16 : i32 to vector<1x4x128xi32>
    %52 = arith.cmpi eq, %11, %51 : vector<1x4x128xi32>
    %cst_17 = arith.constant 0.000000e+00 : f32
    %53 = vector.shape_cast %45 : vector<1x1xf32> to vector<1x1x1xf32>
    %54 = vector.broadcast %53 : vector<1x1x1xf32> to vector<1x4x128xf32>
    %55 = vector.broadcast %cst_17 : f32 to vector<1x4x128xf32>
    %56 = arith.select %52, %54, %55 : vector<1x4x128xi1>, vector<1x4x128xf32>
    %57 = arith.addf %12, %56 : vector<1x4x128xf32>
    %c1_i32 = arith.constant 1 : i32
    %58 = vector.broadcast %c1_i32 : i32 to vector<1x4x128xi32>
    %59 = arith.cmpi eq, %11, %58 : vector<1x4x128xi32>
    %cst_18 = arith.constant 0.000000e+00 : f32
    %60 = vector.shape_cast %50 : vector<1x1xf32> to vector<1x1x1xf32>
    %61 = vector.broadcast %60 : vector<1x1x1xf32> to vector<1x4x128xf32>
    %62 = vector.broadcast %cst_18 : f32 to vector<1x4x128xf32>
    %63 = arith.select %59, %61, %62 : vector<1x4x128xi1>, vector<1x4x128xf32>
    %64 = arith.addf %57, %63 : vector<1x4x128xf32>
    %c0_19 = arith.constant 0 : index
    %c0_20 = arith.constant 0 : index
    %65 = vector.load %arg5[%c0_19, %c0_20] : memref<64x256xf32, #tpu.memory_space<vmem>>, vector<64x256xf32>
    %c0_21 = arith.constant 0 : index
    %c0_22 = arith.constant 0 : index
    %66 = vector.load %arg6[%c0_21, %c0_22] : memref<64x256xf32, #tpu.memory_space<vmem>>, vector<64x256xf32>
    %c0_23 = arith.constant 0 : index
    %c0_24 = arith.constant 0 : index
    %67 = vector.load %arg7[%c0_23, %c0_24] : memref<64x256xf32, #tpu.memory_space<vmem>>, vector<64x256xf32>
    %68 = arith.subf %65, %66 : vector<64x256xf32>
    %cst_25 = arith.constant 9.99999997E-7 : f32
    %69 = vector.broadcast %cst_25 : f32 to vector<64x256xf32>
    %70 = arith.addf %68, %69 : vector<64x256xf32>
    %71 = arith.subf %65, %67 : vector<64x256xf32>
    %cst_26 = arith.constant 9.99999997E-7 : f32
    %72 = vector.broadcast %cst_26 : f32 to vector<64x256xf32>
    %73 = arith.addf %71, %72 : vector<64x256xf32>
    %74 = arith.mulf %70, %70 : vector<64x256xf32>
    %cst_27 = arith.constant dense<0.000000e+00> : vector<64xf32>
    %75 = vector.multi_reduction <add>, %74, %cst_27 [1] : vector<64x256xf32> to vector<64xf32>
    %76 = vector.shape_cast %75 : vector<64xf32> to vector<64x1xf32>
    %77 = math.sqrt %76 : vector<64x1xf32>
    %78 = arith.mulf %73, %73 : vector<64x256xf32>
    %cst_28 = arith.constant dense<0.000000e+00> : vector<64xf32>
    %79 = vector.multi_reduction <add>, %78, %cst_28 [1] : vector<64x256xf32> to vector<64xf32>
    %80 = vector.shape_cast %79 : vector<64xf32> to vector<64x1xf32>
    %81 = math.sqrt %80 : vector<64x1xf32>
    %82 = arith.subf %77, %81 : vector<64x1xf32>
    %cst_29 = arith.constant 3.000000e-01 : f32
    %83 = vector.broadcast %cst_29 : f32 to vector<64x1xf32>
    %84 = arith.addf %82, %83 : vector<64x1xf32>
    %cst_30 = arith.constant 0.000000e+00 : f32
    %85 = vector.broadcast %cst_30 : f32 to vector<64x1xf32>
    %86 = arith.maximumf %84, %85 : vector<64x1xf32>
    %cst_31 = arith.constant 0.000000e+00 : f32
    %87 = vector.broadcast %cst_31 : f32 to vector<64x1xf32>
    %88 = arith.select %10, %86, %87 : vector<64x1xi1>, vector<64x1xf32>
    %cst_32 = arith.constant 0.000000e+00 : f32
    %89 = vector.broadcast %cst_32 : f32 to vector<64x1xf32>
    %90 = arith.cmpf ogt, %88, %89 : vector<64x1xf32>
    %91 = arith.extui %90 : vector<64x1xi1> to vector<64x1xi32>
    %92 = arith.sitofp %91 : vector<64x1xi32> to vector<64x1xf32>
    %93 = vector.shape_cast %88 : vector<64x1xf32> to vector<1x64x1xf32>
    %cst_33 = arith.constant dense<0.000000e+00> : vector<1xf32>
    %94 = vector.multi_reduction <add>, %93, %cst_33 [1, 2] : vector<1x64x1xf32> to vector<1xf32>
    %95 = vector.shape_cast %94 : vector<1xf32> to vector<1x1x1xf32>
    %96 = vector.extract %95[0, 0, 0] : f32 from vector<1x1x1xf32>
    %97 = vector.broadcast %96 : f32 to vector<1x1xf32>
    %98 = vector.shape_cast %92 : vector<64x1xf32> to vector<1x64x1xf32>
    %cst_34 = arith.constant dense<0.000000e+00> : vector<1xf32>
    %99 = vector.multi_reduction <add>, %98, %cst_34 [1, 2] : vector<1x64x1xf32> to vector<1xf32>
    %100 = vector.shape_cast %99 : vector<1xf32> to vector<1x1x1xf32>
    %101 = vector.extract %100[0, 0, 0] : f32 from vector<1x1x1xf32>
    %102 = vector.broadcast %101 : f32 to vector<1x1xf32>
    %c2_i32_35 = arith.constant 2 : i32
    %103 = vector.broadcast %c2_i32_35 : i32 to vector<1x4x128xi32>
    %104 = arith.cmpi eq, %11, %103 : vector<1x4x128xi32>
    %cst_36 = arith.constant 0.000000e+00 : f32
    %105 = vector.shape_cast %97 : vector<1x1xf32> to vector<1x1x1xf32>
    %106 = vector.broadcast %105 : vector<1x1x1xf32> to vector<1x4x128xf32>
    %107 = vector.broadcast %cst_36 : f32 to vector<1x4x128xf32>
    %108 = arith.select %104, %106, %107 : vector<1x4x128xi1>, vector<1x4x128xf32>
    %109 = arith.addf %64, %108 : vector<1x4x128xf32>
    %c3_i32 = arith.constant 3 : i32
    %110 = vector.broadcast %c3_i32 : i32 to vector<1x4x128xi32>
    %111 = arith.cmpi eq, %11, %110 : vector<1x4x128xi32>
    %cst_37 = arith.constant 0.000000e+00 : f32
    %112 = vector.shape_cast %102 : vector<1x1xf32> to vector<1x1x1xf32>
    %113 = vector.broadcast %112 : vector<1x1x1xf32> to vector<1x4x128xf32>
    %114 = vector.broadcast %cst_37 : f32 to vector<1x4x128xf32>
    %115 = arith.select %111, %113, %114 : vector<1x4x128xi1>, vector<1x4x128xf32>
    %116 = arith.addf %109, %115 : vector<1x4x128xf32>
    %c0_38 = arith.constant 0 : index
    %c0_39 = arith.constant 0 : index
    %c0_40 = arith.constant 0 : index
    %117 = vector.load %arg8[%c0_38, %c0_39, %c0_40] : memref<1x4x128xf32, #tpu.memory_space<vmem>>, vector<1x4x128xf32>
    %118 = arith.addf %117, %116 : vector<1x4x128xf32>
    %c0_41 = arith.constant 0 : index
    %c0_42 = arith.constant 0 : index
    %c0_43 = arith.constant 0 : index
    %119 = vector.load %arg8[%c0_41, %c0_42, %c0_43] : memref<1x4x128xf32, #tpu.memory_space<vmem>>, vector<1x4x128xf32>
    tpu.vector_store %arg8[%c0_41, %c0_42, %c0_43], %118 {strides = array<i32>} : memref<1x4x128xf32, #tpu.memory_space<vmem>>, vector<1x4x128xf32>,
    return
  }
  func.func @transform_0(%arg0: i32, %arg1: i32) -> (i32, i32) {
    %c2_i32 = arith.constant 2 : i32
    %0 = arith.muli %arg0, %c2_i32 : i32
    %1 = arith.addi %0, %arg1 : i32
    %c3_i32 = arith.constant 3 : i32
    %2 = arith.minsi %1, %c3_i32 : i32
    %c0_i32 = arith.constant 0 : i32
    %c0_i32_0 = arith.constant 0 : i32
    return %2, %c0_i32 : i32, i32
  }
  func.func @transform_1(%arg0: i32, %arg1: i32) -> (i32, i32) {
    %c2_i32 = arith.constant 2 : i32
    %0 = arith.muli %arg0, %c2_i32 : i32
    %1 = arith.addi %0, %arg1 : i32
    %c3_i32 = arith.constant 3 : i32
    %2 = arith.minsi %1, %c3_i32 : i32
    %c0_i32 = arith.constant 0 : i32
    %c0_i32_0 = arith.constant 0 : i32
    return %2, %c0_i32 : i32, i32
  }
  func.func @transform_2(%arg0: i32, %arg1: i32) -> (i32, i32) {
    %c2_i32 = arith.constant 2 : i32
    %0 = arith.muli %arg0, %c2_i32 : i32
    %1 = arith.addi %0, %arg1 : i32
    %c3_i32 = arith.constant 3 : i32
    %2 = arith.minsi %1, %c3_i32 : i32
    %c0_i32 = arith.constant 0 : i32
    %c0_i32_0 = arith.constant 0 : i32
    return %2, %c0_i32 : i32, i32
  }
  func.func @transform_3(%arg0: i32, %arg1: i32) -> (i32, i32) {
    %c2_i32 = arith.constant 2 : i32
    %0 = arith.muli %arg0, %c2_i32 : i32
    %1 = arith.addi %0, %arg1 : i32
    %c3_i32 = arith.constant 3 : i32
    %2 = arith.minsi %1, %c3_i32 : i32
    %c0_i32 = arith.constant 0 : i32
    %c0_i32_0 = arith.constant 0 : i32
    return %2, %c0_i32 : i32, i32
  }
  func.func @transform_4(%arg0: i32, %arg1: i32) -> (i32, i32) {
    %c2_i32 = arith.constant 2 : i32
    %0 = arith.muli %arg0, %c2_i32 : i32
    %1 = arith.addi %0, %arg1 : i32
    %c3_i32 = arith.constant 3 : i32
    %2 = arith.minsi %1, %c3_i32 : i32
    %c0_i32 = arith.constant 0 : i32
    %c0_i32_0 = arith.constant 0 : i32
    return %2, %c0_i32 : i32, i32
  }
  func.func @transform_5(%arg0: i32, %arg1: i32) -> (i32, i32) {
    %c2_i32 = arith.constant 2 : i32
    %0 = arith.muli %arg0, %c2_i32 : i32
    %1 = arith.addi %0, %arg1 : i32
    %c3_i32 = arith.constant 3 : i32
    %2 = arith.minsi %1, %c3_i32 : i32
    %c0_i32 = arith.constant 0 : i32
    %c0_i32_0 = arith.constant 0 : i32
    return %2, %c0_i32 : i32, i32
  }
  func.func @transform_6(%arg0: i32, %arg1: i32) -> (i32, i32, i32) {
    %c0_i32 = arith.constant 0 : i32
    %c0_i32_0 = arith.constant 0 : i32
    %c0_i32_1 = arith.constant 0 : i32
    return %arg0, %c0_i32, %c0_i32_0 : i32, i32, i32
  }
}

</mosaic_0001>

<llo_original>
// kernel: tpu_custom_call.1
$region0: #{tpu_custom_call.1}
  #allocation0 [shape = 'u32[]', space=smem, size = 0x4, offset = 0x4, fixed_abs, tag = 'smem constant byte address 0x4 - core index']
  #allocation1 [shape = 'u32[144,128]{1,0:T(1,128)}', space=vmem, size = 0x12000, scoped, tag = 'internal scratch']
  %s0 = inlined_call_operand.hbm [shape: f32[200,256], index: 0, kind: input, shape index: {}]
  %s1 = inlined_call_operand.hbm [shape: f32[200,256], index: 1, kind: input, shape index: {}]
  %s2 = inlined_call_operand.hbm [shape: f32[200,256], index: 2, kind: input, shape index: {}]
  %s3 = inlined_call_operand.hbm [shape: f32[200,256], index: 3, kind: input, shape index: {}]
  %s4 = inlined_call_operand.hbm [shape: f32[200,256], index: 4, kind: input, shape index: {}]
  %s5 = inlined_call_operand.hbm [shape: f32[200,256], index: 5, kind: input, shape index: {}]
  %s6 = inlined_call_operand.hbm [shape: f32[2,4,128], index: 6, kind: output, shape index: {}]
  %s7 = sld [smem:[#allocation0]]
  $region85: #{tpu_custom_call.1} parent=0
    _
  %s9 = ssub.s32 1, %s7
  %s10 = scalar_select 0, %s9, %s7
  $region1: #{tpu_custom_call.1} parent=0
    #allocation2 [shape = 'u8[131072]{0}', space=vmem, size = 0x20000, scoped, tag = 'input window, operand 0']
    #allocation3 [shape = 's32[2]{0}', space=sflag, size = 0x8, scoped, tag = 'scoped memory for tpu_custom_call.1']
    #allocation4 [shape = 's32[2]{0}', space=sflag, size = 0x8, scoped, tag = 'scoped memory for tpu_custom_call.1']
    #allocation5 [shape = 'u8[131072]{0}', space=vmem, size = 0x20000, scoped, tag = 'input window, operand 1']
    #allocation6 [shape = 's32[2]{0}', space=sflag, size = 0x8, scoped, tag = 'scoped memory for tpu_custom_call.1']
    #allocation7 [shape = 'u8[131072]{0}', space=vmem, size = 0x20000, scoped, tag = 'input window, operand 2']
    #allocation8 [shape = 'u8[131072]{0}', space=vmem, size = 0x20000, scoped, tag = 'input window, operand 3']
    #allocation9 [shape = 's32[2]{0}', space=sflag, size = 0x8, scoped, tag = 'scoped memory for tpu_custom_call.1']
    #allocation10 [shape = 'u8[131072]{0}', space=vmem, size = 0x20000, scoped, tag = 'input window, operand 4']
    #allocation11 [shape = 'u8[131072]{0}', space=vmem, size = 0x20000, scoped, tag = 'input window, operand 5']
    #allocation12 [shape = 's32[2]{0}', space=sflag, size = 0x8, scoped, tag = 'scoped memory for tpu_custom_call.1']
    #allocation13 [shape = 'u8[4096]{0}', space=vmem, size = 0x1000, scoped, tag = 'output window, operand 0']
    %11 = vsyncpa [#allocation3], 0
    %s12 = scalar_lea.sflag [#allocation3], 1
    %13 = vsyncpa %s12, 0
    %14 = vsyncpa [#allocation6], 0
    %s15 = scalar_lea.sflag [#allocation6], 1
    %16 = vsyncpa %s15, 0
    %17 = vsyncpa [#allocation9], 0
    %s18 = scalar_lea.sflag [#allocation9], 1
    %19 = vsyncpa %s18, 0
    %20 = vsyncpa [#allocation12], 0
    %s21 = scalar_lea.sflag [#allocation12], 1
    %22 = vsyncpa %s21, 0
    %23 = vsyncpa [#allocation4], 0
    %s24 = scalar_lea.sflag [#allocation4], 1
    %25 = vsyncpa %s24, 0
    loop: start=0, step=1, limit=6
    $region2: #{tpu_custom_call.1} parent=1 // loop_pre_header
      _
    $region3: #{tpu_custom_call.1} parent=1 // loop_header
      %s27 = sphi 0, %s31
      %p28 = scmp.ge.s32.totalorder %s27, 6
      %s34 = sphi 0, %s46
      %s35 = sphi 0, %s42
      %s36 = sphi 0, %s34
      %s37 = sphi 0, %s35
      %s38 = sphi 0, %s36
      %s39 = sphi 0, %s37
      %s57 = sphi 0, %s59
      %s60 = sphi 0, %s57
      %s61 = sphi 0, %s60
      %s77 = sphi 0, %s61
      %s91 = sphi 0, %s93
      %s94 = sphi 0, %s91
      %s95 = sphi 0, %s94
      %s111 = sphi 0, %s95
      %s125 = sphi 0, %s127
      %s128 = sphi 0, %s125
      %s129 = sphi 0, %s128
      %s145 = sphi 0, %s129
      %s159 = sphi 0, %s161
      %s162 = sphi 0, %s159
      %s163 = sphi 0, %s162
      %s179 = sphi 0, %s163
      %s193 = sphi 0, %s195
      %s196 = sphi 0, %s193
      %s197 = sphi 0, %s196
      %s213 = sphi 0, %s197
      %s227 = sphi 0, %s229
      %s230 = sphi 0, %s227
      %s231 = sphi 0, %s230
      %s247 = sphi 0, %s231
      %s253 = sphi 0, %s255
      %s256 = sphi 0, %s253
      %s257 = sphi 0, %s256
      %s273 = sphi 0, %s257
    $region4: #{tpu_custom_call.1} parent=1 // loop_header_branch
      %30 = sbr.rel (%p28) target = $region8
    $region5: #{tpu_custom_call.1} parent=1 // loop_body
      %s32 = ssub.s32 %s27, 1
      %s33 = ssub.s32 %s27, 2
      %s40 = sadd.s32 1, %s35
      %p41 = scmp.ge.s32.totalorder %s40, 2
      %s42 = scalar_select %p41, 0, %s40
      %s43 = sadd.s32 1, %s34
      %s44 = scalar_select %p41, %s43, %s34
      %p45 = scmp.ge.s32.totalorder %s44, 2
      %s46 = scalar_select %p45, 0, %s44
      %s47 = smul.u32 %s34, 2
      %s48 = sadd.s32 %s47, %s35
      %p49 = scmp.lt.s32.totalorder %s48, 3
      %s50 = scalar_select %p49, %s48, 3
      %s51 = smul.u32 %s46, 2
      %s52 = sadd.s32 %s51, %s42
      %p53 = scmp.lt.s32.totalorder %s52, 3
      %s54 = scalar_select %p53, %s52, 3
      %s55 = ssub.s32 %s50, %s54
      %p56 = scmp.eq.s32.totalorder %s55, 0
      %s58 = sadd.s32 %s57, 1
      %s59 = scalar_select %p56, %s57, %s58
      %p62 = pneg %p56
      %p63 = scmp.eq.s32.totalorder %s27, 3
      %p64 = por %p62, %p63
      %p65 = scmp.ne.s32.totalorder %s57, %s60
      %p66 = scmp.eq.s32.totalorder %s27, 0
      %p67 = por %p65, %p66
      %p68 = scmp.ne.s32.totalorder %s57, %s60
      %p69 = scmp.eq.s32.totalorder %s32, 3
      %p70 = por %p68, %p69
      %p71 = scmp.ne.s32.totalorder %s60, %s61
      %p72 = scmp.eq.s32.totalorder %s32, 0
      %p73 = por %p71, %p72
      %p74 = scmp.ne.s32.totalorder %s60, %s61
      %p75 = scmp.eq.s32.totalorder %s33, 3
      %p76 = por %p74, %p75
      %p78 = scmp.ne.s32.totalorder %s61, %s77
      %p79 = scmp.eq.s32.totalorder %s33, 0
      %p80 = por %p78, %p79
      %s81 = smul.u32 %s34, 2
      %s82 = sadd.s32 %s81, %s35
      %p83 = scmp.lt.s32.totalorder %s82, 3
      %s84 = scalar_select %p83, %s82, 3
      %s85 = smul.u32 %s46, 2
      %s86 = sadd.s32 %s85, %s42
      %p87 = scmp.lt.s32.totalorder %s86, 3
      %s88 = scalar_select %p87, %s86, 3
      %s89 = ssub.s32 %s84, %s88
      %p90 = scmp.eq.s32.totalorder %s89, 0
      %s92 = sadd.s32 %s91, 1
      %s93 = scalar_select %p90, %s91, %s92
      %p96 = pneg %p90
      %p97 = scmp.eq.s32.totalorder %s27, 3
      %p98 = por %p96, %p97
      %p99 = scmp.ne.s32.totalorder %s91, %s94
      %p100 = scmp.eq.s32.totalorder %s27, 0
      %p101 = por %p99, %p100
      %p102 = scmp.ne.s32.totalorder %s91, %s94
      %p103 = scmp.eq.s32.totalorder %s32, 3
      %p104 = por %p102, %p103
      %p105 = scmp.ne.s32.totalorder %s94, %s95
      %p106 = scmp.eq.s32.totalorder %s32, 0
      %p107 = por %p105, %p106
      %p108 = scmp.ne.s32.totalorder %s94, %s95
      %p109 = scmp.eq.s32.totalorder %s33, 3
      %p110 = por %p108, %p109
      %p112 = scmp.ne.s32.totalorder %s95, %s111
      %p113 = scmp.eq.s32.totalorder %s33, 0
      %p114 = por %p112, %p113
      %s115 = smul.u32 %s34, 2
      %s116 = sadd.s32 %s115, %s35
      %p117 = scmp.lt.s32.totalorder %s116, 3
      %s118 = scalar_select %p117, %s116, 3
      %s119 = smul.u32 %s46, 2
      %s120 = sadd.s32 %s119, %s42
      %p121 = scmp.lt.s32.totalorder %s120, 3
      %s122 = scalar_select %p121, %s120, 3
      %s123 = ssub.s32 %s118, %s122
      %p124 = scmp.eq.s32.totalorder %s123, 0
      %s126 = sadd.s32 %s125, 1
      %s127 = scalar_select %p124, %s125, %s126
      %p130 = pneg %p124
      %p131 = scmp.eq.s32.totalorder %s27, 3
      %p132 = por %p130, %p131
      %p133 = scmp.ne.s32.totalorder %s125, %s128
      %p134 = scmp.eq.s32.totalorder %s27, 0
      %p135 = por %p133, %p134
      %p136 = scmp.ne.s32.totalorder %s125, %s128
      %p137 = scmp.eq.s32.totalorder %s32, 3
      %p138 = por %p136, %p137
      %p139 = scmp.ne.s32.totalorder %s128, %s129
      %p140 = scmp.eq.s32.totalorder %s32, 0
      %p141 = por %p139, %p140
      %p142 = scmp.ne.s32.totalorder %s128, %s129
      %p143 = scmp.eq.s32.totalorder %s33, 3
      %p144 = por %p142, %p143
      %p146 = scmp.ne.s32.totalorder %s129, %s145
      %p147 = scmp.eq.s32.totalorder %s33, 0
      %p148 = por %p146, %p147
      %s149 = smul.u32 %s34, 2
      %s150 = sadd.s32 %s149, %s35
      %p151 = scmp.lt.s32.totalorder %s150, 3
      %s152 = scalar_select %p151, %s150, 3
      %s153 = smul.u32 %s46, 2
      %s154 = sadd.s32 %s153, %s42
      %p155 = scmp.lt.s32.totalorder %s154, 3
      %s156 = scalar_select %p155, %s154, 3
      %s157 = ssub.s32 %s152, %s156
      %p158 = scmp.eq.s32.totalorder %s157, 0
      %s160 = sadd.s32 %s159, 1
      %s161 = scalar_select %p158, %s159, %s160
      %p164 = pneg %p158
      %p165 = scmp.eq.s32.totalorder %s27, 3
      %p166 = por %p164, %p165
      %p167 = scmp.ne.s32.totalorder %s159, %s162
      %p168 = scmp.eq.s32.totalorder %s27, 0
      %p169 = por %p167, %p168
      %p170 = scmp.ne.s32.totalorder %s159, %s162
      %p171 = scmp.eq.s32.totalorder %s32, 3
      %p172 = por %p170, %p171
      %p173 = scmp.ne.s32.totalorder %s162, %s163
      %p174 = scmp.eq.s32.totalorder %s32, 0
      %p175 = por %p173, %p174
      %p176 = scmp.ne.s32.totalorder %s162, %s163
      %p177 = scmp.eq.s32.totalorder %s33, 3
      %p178 = por %p176, %p177
      %p180 = scmp.ne.s32.totalorder %s163, %s179
      %p181 = scmp.eq.s32.totalorder %s33, 0
      %p182 = por %p180, %p181
      %s183 = smul.u32 %s34, 2
      %s184 = sadd.s32 %s183, %s35
      %p185 = scmp.lt.s32.totalorder %s184, 3
      %s186 = scalar_select %p185, %s184, 3
      %s187 = smul.u32 %s46, 2
      %s188 = sadd.s32 %s187, %s42
      %p189 = scmp.lt.s32.totalorder %s188, 3
      %s190 = scalar_select %p189, %s188, 3
      %s191 = ssub.s32 %s186, %s190
      %p192 = scmp.eq.s32.totalorder %s191, 0
      %s194 = sadd.s32 %s193, 1
      %s195 = scalar_select %p192, %s193, %s194
      %p198 = pneg %p192
      %p199 = scmp.eq.s32.totalorder %s27, 3
      %p200 = por %p198, %p199
      %p201 = scmp.ne.s32.totalorder %s193, %s196
      %p202 = scmp.eq.s32.totalorder %s27, 0
      %p203 = por %p201, %p202
      %p204 = scmp.ne.s32.totalorder %s193, %s196
      %p205 = scmp.eq.s32.totalorder %s32, 3
      %p206 = por %p204, %p205
      %p207 = scmp.ne.s32.totalorder %s196, %s197
      %p208 = scmp.eq.s32.totalorder %s32, 0
      %p209 = por %p207, %p208
      %p210 = scmp.ne.s32.totalorder %s196, %s197
      %p211 = scmp.eq.s32.totalorder %s33, 3
      %p212 = por %p210, %p211
      %p214 = scmp.ne.s32.totalorder %s197, %s213
      %p215 = scmp.eq.s32.totalorder %s33, 0
      %p216 = por %p214, %p215
      %s217 = smul.u32 %s34, 2
      %s218 = sadd.s32 %s217, %s35
      %p219 = scmp.lt.s32.totalorder %s218, 3
      %s220 = scalar_select %p219, %s218, 3
      %s221 = smul.u32 %s46, 2
      %s222 = sadd.s32 %s221, %s42
      %p223 = scmp.lt.s32.totalorder %s222, 3
      %s224 = scalar_select %p223, %s222, 3
      %s225 = ssub.s32 %s220, %s224
      %p226 = scmp.eq.s32.totalorder %s225, 0
      %s228 = sadd.s32 %s227, 1
      %s229 = scalar_select %p226, %s227, %s228
      %p232 = pneg %p226
      %p233 = scmp.eq.s32.totalorder %s27, 3
      %p234 = por %p232, %p233
      %p235 = scmp.ne.s32.totalorder %s227, %s230
      %p236 = scmp.eq.s32.totalorder %s27, 0
      %p237 = por %p235, %p236
      %p238 = scmp.ne.s32.totalorder %s227, %s230
      %p239 = scmp.eq.s32.totalorder %s32, 3
      %p240 = por %p238, %p239
      %p241 = scmp.ne.s32.totalorder %s230, %s231
      %p242 = scmp.eq.s32.totalorder %s32, 0
      %p243 = por %p241, %p242
      %p244 = scmp.ne.s32.totalorder %s230, %s231
      %p245 = scmp.eq.s32.totalorder %s33, 3
      %p246 = por %p244, %p245
      %p248 = scmp.ne.s32.totalorder %s231, %s247
      %p249 = scmp.eq.s32.totalorder %s33, 0
      %p250 = por %p248, %p249
      %s251 = ssub.s32 %s34, %s46
      %p252 = scmp.eq.s32.totalorder %s251, 0
      %s254 = sadd.s32 %s253, 1
      %s255 = scalar_select %p252, %s253, %s254
      %p258 = pneg %p252
      %p259 = scmp.eq.s32.totalorder %s27, 3
      %p260 = por %p258, %p259
      %p261 = scmp.ne.s32.totalorder %s253, %s256
      %p262 = scmp.eq.s32.totalorder %s27, 0
      %p263 = por %p261, %p262
      %p264 = scmp.ne.s32.totalorder %s253, %s256
      %p265 = scmp.eq.s32.totalorder %s32, 3
      %p266 = por %p264, %p265
      %p267 = scmp.ne.s32.totalorder %s256, %s257
      %p268 = scmp.eq.s32.totalorder %s32, 0
      %p269 = por %p267, %p268
      %p270 = scmp.ne.s32.totalorder %s256, %s257
      %p271 = scmp.eq.s32.totalorder %s33, 3
      %p272 = por %p270, %p271
      %p274 = scmp.ne.s32.totalorder %s257, %s273
      %p275 = scmp.eq.s32.totalorder %s33, 0
      %p276 = por %p274, %p275
      %p277 = scmp.le.s32.totalorder 1, %s27
      %p278 = scmp.lt.s32.totalorder %s27, 5
      %p279 = pnand %p277, %p278
      %p280 = pneg %p279
      // Predicated region
      $region9: #{tpu_custom_call.1} parent=5 // pred_check
        _
      $region10: #{tpu_custom_call.1} parent=5 // pred_check_branch
        %282 = sbr.rel (%p279) target = $region12
      $region11: #{tpu_custom_call.1} parent=5 // pred_region
        %s283 = ssub.s32 %s27, 1
      $region12: #{tpu_custom_call.1} parent=5 // pred_fallthru
        _
      %p284 = scmp.lt.s32.totalorder %s27, 4
      // Predicated region
      $region13: #{tpu_custom_call.1} parent=5 // pred_check
        %p285 = pneg %p284
      $region14: #{tpu_custom_call.1} parent=5 // pred_check_branch
        %287 = sbr.rel (%p285) target = $region16
      $region15: #{tpu_custom_call.1} parent=5 // pred_region
        // Predicated region
        $region17: #{tpu_custom_call.1} parent=15 // pred_check
          %p288 = pneg %p67
        $region18: #{tpu_custom_call.1} parent=15 // pred_check_branch
          %290 = sbr.rel (%p288) target = $region20
        $region19: #{tpu_custom_call.1} parent=15 // pred_region
          %s291 = sand.u32 %s57, 1
          %s292 = scalar_lea.sflag [#allocation3], %s291
          %s293 = sand.u32 %s57, 1
          %s294 = smul.addr %s293, 128
          %s295 = scalar_lea.vmem [#allocation2], %s294
          %s296 = smul.u32 %s34, 2
          %s297 = sadd.s32 %s296, %s35
          %p298 = scmp.lt.s32.totalorder %s297, 3
          %s299 = scalar_select %p298, %s297, 3
          %s300 = smul.u32 8, %s299
          %s301 = ssub.s32 25, %s300
          %p302 = scmp.lt.s32.totalorder %s301, 8
          %s303 = scalar_select %p302, %s301, 8
          %s304 = smul.u32 128, %s303
          %s305 = smul.u32 %s304, 2
          %s307 = ssub.s32 2048, %s305
          %308 = vsyncadd %s292, %s307
          %p309 = scmp.ne.s32.totalorder 0, %s305
          %s310 = smul.addr %s300, 2
          %s311 = smul.addr %s310, 128
          %s312 = scalar_lea.hbm %s0, %s311
          %s313 = smul.u32 16, %s303
          %s314 = sshll.u32 %s295, 4
          %s315 = int_to_ptr.vmem [resolvable:$true] %s314
          %s316 = sshll.u32 %s313, 4
          %320 = dma.hbm_to_vmem [thread:$0]  (%p309), %s312, %s316, %s315, %s292, 256, 256, 16
        $region20: #{tpu_custom_call.1} parent=15 // pred_fallthru
          _
        // Predicated region
        $region21: #{tpu_custom_call.1} parent=15 // pred_check
          %p321 = pneg %p101
        $region22: #{tpu_custom_call.1} parent=15 // pred_check_branch
          %323 = sbr.rel (%p321) target = $region24
        $region23: #{tpu_custom_call.1} parent=15 // pred_region
          %s324 = sand.u32 %s27, 1
          %s325 = scalar_lea.sflag [#allocation6], %s324
          %s326 = sand.u32 %s91, 1
          %s327 = smul.addr %s326, 128
          %s328 = scalar_lea.vmem [#allocation5], %s327
          %s329 = smul.u32 %s34, 2
          %s330 = sadd.s32 %s329, %s35
          %p331 = scmp.lt.s32.totalorder %s330, 3
          %s332 = scalar_select %p331, %s330, 3
          %s333 = smul.u32 8, %s332
          %s334 = ssub.s32 25, %s333
          %p335 = scmp.lt.s32.totalorder %s334, 8
          %s336 = scalar_select %p335, %s334, 8
          %s337 = smul.u32 128, %s336
          %s338 = smul.u32 %s337, 2
          %s340 = ssub.s32 2048, %s338
          %341 = vsyncadd %s325, %s340
          %p342 = scmp.ne.s32.totalorder 0, %s338
          %s343 = smul.addr %s333, 2
          %s344 = smul.addr %s343, 128
          %s345 = scalar_lea.hbm %s1, %s344
          %s346 = smul.u32 16, %s336
          %s347 = sshll.u32 %s328, 4
          %s348 = int_to_ptr.vmem [resolvable:$true] %s347
          %s349 = sshll.u32 %s346, 4
          %353 = dma.hbm_to_vmem [thread:$0]  (%p342), %s345, %s349, %s348, %s325, 256, 256, 16
        $region24: #{tpu_custom_call.1} parent=15 // pred_fallthru
          _
        // Predicated region
        $region25: #{tpu_custom_call.1} parent=15 // pred_check
          %p354 = pneg %p135
        $region26: #{tpu_custom_call.1} parent=15 // pred_check_branch
          %356 = sbr.rel (%p354) target = $region28
        $region27: #{tpu_custom_call.1} parent=15 // pred_region
          %s357 = sand.u32 %s27, 1
          %s358 = scalar_lea.sflag [#allocation6], %s357
          %s359 = sand.u32 %s125, 1
          %s360 = smul.addr %s359, 128
          %s361 = scalar_lea.vmem [#allocation7], %s360
          %s362 = smul.u32 %s34, 2
          %s363 = sadd.s32 %s362, %s35
          %p364 = scmp.lt.s32.totalorder %s363, 3
          %s365 = scalar_select %p364, %s363, 3
          %s366 = smul.u32 8, %s365
          %s367 = ssub.s32 25, %s366
          %p368 = scmp.lt.s32.totalorder %s367, 8
          %s369 = scalar_select %p368, %s367, 8
          %s370 = smul.u32 128, %s369
          %s371 = smul.u32 %s370, 2
          %s373 = ssub.s32 2048, %s371
          %374 = vsyncadd %s358, %s373
          %p375 = scmp.ne.s32.totalorder 0, %s371
          %s376 = smul.addr %s366, 2
          %s377 = smul.addr %s376, 128
          %s378 = scalar_lea.hbm %s2, %s377
          %s379 = smul.u32 16, %s369
          %s380 = sshll.u32 %s361, 4
          %s381 = int_to_ptr.vmem [resolvable:$true] %s380
          %s382 = sshll.u32 %s379, 4
          %386 = dma.hbm_to_vmem [thread:$0]  (%p375), %s378, %s382, %s381, %s358, 256, 256, 16
        $region28: #{tpu_custom_call.1} parent=15 // pred_fallthru
          _
        // Predicated region
        $region29: #{tpu_custom_call.1} parent=15 // pred_check
          %p387 = pneg %p169
        $region30: #{tpu_custom_call.1} parent=15 // pred_check_branch
          %389 = sbr.rel (%p387) target = $region32
        $region31: #{tpu_custom_call.1} parent=15 // pred_region
          %s390 = sand.u32 %s27, 1
          %s391 = scalar_lea.sflag [#allocation9], %s390
          %s392 = sand.u32 %s159, 1
          %s393 = smul.addr %s392, 128
          %s394 = scalar_lea.vmem [#allocation8], %s393
          %s395 = smul.u32 %s34, 2
          %s396 = sadd.s32 %s395, %s35
          %p397 = scmp.lt.s32.totalorder %s396, 3
          %s398 = scalar_select %p397, %s396, 3
          %s399 = smul.u32 8, %s398
          %s400 = ssub.s32 25, %s399
          %p401 = scmp.lt.s32.totalorder %s400, 8
          %s402 = scalar_select %p401, %s400, 8
          %s403 = smul.u32 128, %s402
          %s404 = smul.u32 %s403, 2
          %s406 = ssub.s32 2048, %s404
          %407 = vsyncadd %s391, %s406
          %p408 = scmp.ne.s32.totalorder 0, %s404
          %s409 = smul.addr %s399, 2
          %s410 = smul.addr %s409, 128
          %s411 = scalar_lea.hbm %s3, %s410
          %s412 = smul.u32 16, %s402
          %s413 = sshll.u32 %s394, 4
          %s414 = int_to_ptr.vmem [resolvable:$true] %s413
          %s415 = sshll.u32 %s412, 4
          %419 = dma.hbm_to_vmem [thread:$0]  (%p408), %s411, %s415, %s414, %s391, 256, 256, 16
        $region32: #{tpu_custom_call.1} parent=15 // pred_fallthru
          _
        // Predicated region
        $region33: #{tpu_custom_call.1} parent=15 // pred_check
          %p420 = pneg %p203
        $region34: #{tpu_custom_call.1} parent=15 // pred_check_branch
          %422 = sbr.rel (%p420) target = $region36
        $region35: #{tpu_custom_call.1} parent=15 // pred_region
          %s423 = sand.u32 %s27, 1
          %s424 = scalar_lea.sflag [#allocation9], %s423
          %s425 = sand.u32 %s193, 1
          %s426 = smul.addr %s425, 128
          %s427 = scalar_lea.vmem [#allocation10], %s426
          %s428 = smul.u32 %s34, 2
          %s429 = sadd.s32 %s428, %s35
          %p430 = scmp.lt.s32.totalorder %s429, 3
          %s431 = scalar_select %p430, %s429, 3
          %s432 = smul.u32 8, %s431
          %s433 = ssub.s32 25, %s432
          %p434 = scmp.lt.s32.totalorder %s433, 8
          %s435 = scalar_select %p434, %s433, 8
          %s436 = smul.u32 128, %s435
          %s437 = smul.u32 %s436, 2
          %s439 = ssub.s32 2048, %s437
          %440 = vsyncadd %s424, %s439
          %p441 = scmp.ne.s32.totalorder 0, %s437
          %s442 = smul.addr %s432, 2
          %s443 = smul.addr %s442, 128
          %s444 = scalar_lea.hbm %s4, %s443
          %s445 = smul.u32 16, %s435
          %s446 = sshll.u32 %s427, 4
          %s447 = int_to_ptr.vmem [resolvable:$true] %s446
          %s448 = sshll.u32 %s445, 4
          %452 = dma.hbm_to_vmem [thread:$0]  (%p441), %s444, %s448, %s447, %s424, 256, 256, 16
        $region36: #{tpu_custom_call.1} parent=15 // pred_fallthru
          _
        // Predicated region
        $region37: #{tpu_custom_call.1} parent=15 // pred_check
          %p453 = pneg %p237
        $region38: #{tpu_custom_call.1} parent=15 // pred_check_branch
          %455 = sbr.rel (%p453) target = $region40
        $region39: #{tpu_custom_call.1} parent=15 // pred_region
          %s456 = sand.u32 %s227, 1
          %s457 = scalar_lea.sflag [#allocation12], %s456
          %s458 = sand.u32 %s227, 1
          %s459 = smul.addr %s458, 128
          %s460 = scalar_lea.vmem [#allocation11], %s459
          %s461 = smul.u32 %s34, 2
          %s462 = sadd.s32 %s461, %s35
          %p463 = scmp.lt.s32.totalorder %s462, 3
          %s464 = scalar_select %p463, %s462, 3
          %s465 = smul.u32 8, %s464
          %s466 = ssub.s32 25, %s465
          %p467 = scmp.lt.s32.totalorder %s466, 8
          %s468 = scalar_select %p467, %s466, 8
          %s469 = smul.u32 128, %s468
          %s470 = smul.u32 %s469, 2
          %s472 = ssub.s32 2048, %s470
          %473 = vsyncadd %s457, %s472
          %p474 = scmp.ne.s32.totalorder 0, %s470
          %s475 = smul.addr %s465, 2
          %s476 = smul.addr %s475, 128
          %s477 = scalar_lea.hbm %s5, %s476
          %s478 = smul.u32 16, %s468
          %s479 = sshll.u32 %s460, 4
          %s480 = int_to_ptr.vmem [resolvable:$true] %s479
          %s481 = sshll.u32 %s478, 4
          %485 = dma.hbm_to_vmem [thread:$0]  (%p474), %s477, %s481, %s480, %s457, 256, 256, 16
        $region40: #{tpu_custom_call.1} parent=15 // pred_fallthru
          _
      $region16: #{tpu_custom_call.1} parent=5 // pred_fallthru
        _
      %p486 = scmp.le.s32.totalorder 1, %s27
      %p487 = scmp.lt.s32.totalorder %s27, 5
      %p488 = pnand %p486, %p487
      %p489 = pneg %p488
      // Predicated region
      $region41: #{tpu_custom_call.1} parent=5 // pred_check
        _
      $region42: #{tpu_custom_call.1} parent=5 // pred_check_branch
        %491 = sbr.rel (%p488) target = $region44
      $region43: #{tpu_custom_call.1} parent=5 // pred_region
        %s492 = ssub.s32 %s27, 1
        %s493 = sand.u32 %s60, 1
        %s494 = scalar_lea.sflag [#allocation3], %s493
        %s495 = sand.u32 %s60, 1
        %s496 = smul.addr %s495, 128
        %s497 = scalar_lea.vmem [#allocation2], %s496
        // Predicated region
        $region45: #{tpu_custom_call.1} parent=43 // pred_check
          %p498 = pneg %p73
        $region46: #{tpu_custom_call.1} parent=43 // pred_check_branch
          %500 = sbr.rel (%p498) target = $region48
        $region47: #{tpu_custom_call.1} parent=43 // pred_region
          %501 = dma.done %s494, 2048
        $region48: #{tpu_custom_call.1} parent=43 // pred_fallthru
          _
        %s502 = sand.u32 %s32, 1
        %s503 = scalar_lea.sflag [#allocation6], %s502
        %s504 = sand.u32 %s94, 1
        %s505 = smul.addr %s504, 128
        %s506 = scalar_lea.vmem [#allocation5], %s505
        // Predicated region
        $region49: #{tpu_custom_call.1} parent=43 // pred_check
          %p507 = pneg %p107
        $region50: #{tpu_custom_call.1} parent=43 // pred_check_branch
          %509 = sbr.rel (%p507) target = $region52
        $region51: #{tpu_custom_call.1} parent=43 // pred_region
          %510 = dma.done %s503, 2048
        $region52: #{tpu_custom_call.1} parent=43 // pred_fallthru
          _
        %s511 = sand.u32 %s32, 1
        %s512 = scalar_lea.sflag [#allocation6], %s511
        %s513 = sand.u32 %s128, 1
        %s514 = smul.addr %s513, 128
        %s515 = scalar_lea.vmem [#allocation7], %s514
        // Predicated region
        $region53: #{tpu_custom_call.1} parent=43 // pred_check
          %p516 = pneg %p141
        $region54: #{tpu_custom_call.1} parent=43 // pred_check_branch
          %518 = sbr.rel (%p516) target = $region56
        $region55: #{tpu_custom_call.1} parent=43 // pred_region
          %519 = dma.done %s512, 2048
        $region56: #{tpu_custom_call.1} parent=43 // pred_fallthru
          _
        %s520 = sand.u32 %s32, 1
        %s521 = scalar_lea.sflag [#allocation9], %s520
        %s522 = sand.u32 %s162, 1
        %s523 = smul.addr %s522, 128
        %s524 = scalar_lea.vmem [#allocation8], %s523
        // Predicated region
        $region57: #{tpu_custom_call.1} parent=43 // pred_check
          %p525 = pneg %p175
        $region58: #{tpu_custom_call.1} parent=43 // pred_check_branch
          %527 = sbr.rel (%p525) target = $region60
        $region59: #{tpu_custom_call.1} parent=43 // pred_region
          %528 = dma.done %s521, 2048
        $region60: #{tpu_custom_call.1} parent=43 // pred_fallthru
          _
        %s529 = sand.u32 %s32, 1
        %s530 = scalar_lea.sflag [#allocation9], %s529
        %s531 = sand.u32 %s196, 1
        %s532 = smul.addr %s531, 128
        %s533 = scalar_lea.vmem [#allocation10], %s532
        // Predicated region
        $region61: #{tpu_custom_call.1} parent=43 // pred_check
          %p534 = pneg %p209
        $region62: #{tpu_custom_call.1} parent=43 // pred_check_branch
          %536 = sbr.rel (%p534) target = $region64
        $region63: #{tpu_custom_call.1} parent=43 // pred_region
          %537 = dma.done %s530, 2048
        $region64: #{tpu_custom_call.1} parent=43 // pred_fallthru
          _
        %s538 = sand.u32 %s230, 1
        %s539 = scalar_lea.sflag [#allocation12], %s538
        %s540 = sand.u32 %s230, 1
        %s541 = smul.addr %s540, 128
        %s542 = scalar_lea.vmem [#allocation11], %s541
        // Predicated region
        $region65: #{tpu_custom_call.1} parent=43 // pred_check
          %p543 = pneg %p243
        $region66: #{tpu_custom_call.1} parent=43 // pred_check_branch
          %545 = sbr.rel (%p543) target = $region68
        $region67: #{tpu_custom_call.1} parent=43 // pred_region
          %546 = dma.done %s539, 2048
        $region68: #{tpu_custom_call.1} parent=43 // pred_fallthru
          _
        %s547 = sand.u32 %s60, 1
        %s548 = scalar_lea.sflag [#allocation3], %s547
        %s549 = sand.u32 %s60, 1
        %s550 = smul.addr %s549, 128
        %s551 = scalar_lea.vmem [#allocation2], %s550
        %p552 = pneg %p73
        %p553 = pneg %p70
        %s554 = sand.u32 %s32, 1
        %s555 = scalar_lea.sflag [#allocation6], %s554
        %s556 = sand.u32 %s94, 1
        %s557 = smul.addr %s556, 128
        %s558 = scalar_lea.vmem [#allocation5], %s557
        %p559 = pneg %p107
        %p560 = pneg %p104
        %s561 = sand.u32 %s32, 1
        %s562 = scalar_lea.sflag [#allocation6], %s561
        %s563 = sand.u32 %s128, 1
        %s564 = smul.addr %s563, 128
        %s565 = scalar_lea.vmem [#allocation7], %s564
        %p566 = pneg %p141
        %p567 = pneg %p138
        %s568 = sand.u32 %s32, 1
        %s569 = scalar_lea.sflag [#allocation9], %s568
        %s570 = sand.u32 %s162, 1
        %s571 = smul.addr %s570, 128
        %s572 = scalar_lea.vmem [#allocation8], %s571
        %p573 = pneg %p175
        %p574 = pneg %p172
        %s575 = sand.u32 %s32, 1
        %s576 = scalar_lea.sflag [#allocation9], %s575
        %s577 = sand.u32 %s196, 1
        %s578 = smul.addr %s577, 128
        %s579 = scalar_lea.vmem [#allocation10], %s578
        %p580 = pneg %p209
        %p581 = pneg %p206
        %s582 = sand.u32 %s230, 1
        %s583 = scalar_lea.sflag [#allocation12], %s582
        %s584 = sand.u32 %s230, 1
        %s585 = smul.addr %s584, 128
        %s586 = scalar_lea.vmem [#allocation11], %s585
        %p587 = pneg %p243
        %p588 = pneg %p240
        %p589 = pneg %p269
        %p590 = pneg %p266
        %s591 = sand.u32 %s256, 1
        %s592 = scalar_lea.sflag [#allocation4], %s591
        %s593 = sand.u32 %s256, 1
        %s594 = smul.addr %s593, 4
        %s595 = scalar_lea.vmem [#allocation13], %s594
        %s596 = smul.u32 %s36, 2
        %s597 = sadd.s32 %s596, %s37
        %p598 = scmp.lt.s32.totalorder %s597, 3
        %s599 = scalar_select %p598, %s597, 3
        %s600 = smul.u32 8, %s599
        %s601 = ssub.s32 25, %s600
        %p602 = scmp.lt.s32.totalorder %s601, 8
        %s603 = scalar_select %p602, %s601, 8
        %s604 = smul.u32 128, %s603
        %s605 = smul.u32 %s604, 2
        %s606 = smul.u32 %s36, 2
        %s607 = sadd.s32 %s606, %s37
        %p608 = scmp.lt.s32.totalorder %s607, 3
        %s609 = scalar_select %p608, %s607, 3
        %s610 = smul.u32 8, %s609
        %s611 = ssub.s32 25, %s610
        %p612 = scmp.lt.s32.totalorder %s611, 8
        %s613 = scalar_select %p612, %s611, 8
        %s614 = smul.u32 128, %s613
        %s615 = smul.u32 %s614, 2
        %s616 = smul.u32 %s36, 2
        %s617 = sadd.s32 %s616, %s37
        %p618 = scmp.lt.s32.totalorder %s617, 3
        %s619 = scalar_select %p618, %s617, 3
        %s620 = smul.u32 8, %s619
        %s621 = ssub.s32 25, %s620
        %p622 = scmp.lt.s32.totalorder %s621, 8
        %s623 = scalar_select %p622, %s621, 8
        %s624 = smul.u32 128, %s623
        %s625 = smul.u32 %s624, 2
        %s626 = smul.u32 %s36, 2
        %s627 = sadd.s32 %s626, %s37
        %p628 = scmp.lt.s32.totalorder %s627, 3
        %s629 = scalar_select %p628, %s627, 3
        %s630 = smul.u32 8, %s629
        %s631 = ssub.s32 25, %s630
        %p632 = scmp.lt.s32.totalorder %s631, 8
        %s633 = scalar_select %p632, %s631, 8
        %s634 = smul.u32 128, %s633
        %s635 = smul.u32 %s634, 2
        %s636 = smul.u32 %s36, 2
        %s637 = sadd.s32 %s636, %s37
        %p638 = scmp.lt.s32.totalorder %s637, 3
        %s639 = scalar_select %p638, %s637, 3
        %s640 = smul.u32 8, %s639
        %s641 = ssub.s32 25, %s640
        %p642 = scmp.lt.s32.totalorder %s641, 8
        %s643 = scalar_select %p642, %s641, 8
        %s644 = smul.u32 128, %s643
        %s645 = smul.u32 %s644, 2
        %s646 = smul.u32 %s36, 2
        %s647 = sadd.s32 %s646, %s37
        %p648 = scmp.lt.s32.totalorder %s647, 3
        %s649 = scalar_select %p648, %s647, 3
        %s650 = smul.u32 8, %s649
        %s651 = ssub.s32 25, %s650
        %p652 = scmp.lt.s32.totalorder %s651, 8
        %s653 = scalar_select %p652, %s651, 8
        %s654 = smul.u32 128, %s653
        %s655 = smul.u32 %s654, 2
        %p656 = scmp.eq.s32.totalorder %s37, 0
        // Predicated region
        $region69: #{tpu_custom_call.1} parent=43 // pred_check
          %p657 = pneg %p656
        $region70: #{tpu_custom_call.1} parent=43 // pred_check_branch
          %659 = sbr.rel (%p657) target = $region72
        $region71: #{tpu_custom_call.1} parent=43 // pred_region
          %660 = vst [vmem:[%s595] sm:$0xf] 0.0
        $region72: #{tpu_custom_call.1} parent=43 // pred_fallthru
          _
        %s661 = smul.u32 %s36, 2
        %s662 = sadd.s32 %s661, %s37
        %s663 = smul.u32 %s662, 64
        %v664 = vlaneseq
        %v665 = vshrl.u32 %v664, 7
        %v666 = vadd.s32 %v665, 8
        %v667 = vadd.s32 %v665, 16
        %v668 = vadd.s32 %v665, 24
        %v669 = vadd.s32 %v665, 32
        %v670 = vadd.s32 %v665, 40
        %v671 = vadd.s32 %v665, 48
        %v672 = vadd.s32 %v665, 56
        %v673 = vstv %s663
        %v674 = vadd.s32 %v673, %v665
        %v675 = vadd.s32 %v673, %v666
        %v676 = vadd.s32 %v673, %v667
        %v677 = vadd.s32 %v673, %v668
        %v678 = vadd.s32 %v673, %v669
        %v679 = vadd.s32 %v673, %v670
        %v680 = vadd.s32 %v673, %v671
        %v681 = vadd.s32 %v673, %v672
        %vm682 = vcmp.lt.s32.totalorder %v674, 200
        %vm683 = vcmp.lt.s32.totalorder %v675, 200
        %vm684 = vcmp.lt.s32.totalorder %v676, 200
        %vm685 = vcmp.lt.s32.totalorder %v677, 200
        %vm686 = vcmp.lt.s32.totalorder %v678, 200
        %vm687 = vcmp.lt.s32.totalorder %v679, 200
        %vm688 = vcmp.lt.s32.totalorder %v680, 200
        %vm689 = vcmp.lt.s32.totalorder %v681, 200
        %v690 = vld [vmem:[%s497] sm:$0xff]
        %v691 = vld [vmem:[%s497 + $0x8] sm:$0xff]
        %v692 = vld [vmem:[%s497 + $0x10] sm:$0xff]
        %v693 = vld [vmem:[%s497 + $0x18] sm:$0xff]
        %v694 = vld [vmem:[%s497 + $0x20] sm:$0xff]
        %v695 = vld [vmem:[%s497 + $0x28] sm:$0xff]
        %v696 = vld [vmem:[%s497 + $0x30] sm:$0xff]
        %v697 = vld [vmem:[%s497 + $0x38] sm:$0xff]
        %v698 = vld [vmem:[%s497 + $0x40] sm:$0xff]
        %v699 = vld [vmem:[%s497 + $0x48] sm:$0xff]
        %v700 = vld [vmem:[%s497 + $0x50] sm:$0xff]
        %v701 = vld [vmem:[%s497 + $0x58] sm:$0xff]
        %v702 = vld [vmem:[%s497 + $0x60] sm:$0xff]
        %v703 = vld [vmem:[%s497 + $0x68] sm:$0xff]
        %v704 = vld [vmem:[%s497 + $0x70] sm:$0xff]
        %v705 = vld [vmem:[%s497 + $0x78] sm:$0xff]
        %v706 = vld [vmem:[%s506] sm:$0xff]
        %v707 = vld [vmem:[%s506 + $0x8] sm:$0xff]
        %v708 = vld [vmem:[%s506 + $0x10] sm:$0xff]
        %v709 = vld [vmem:[%s506 + $0x18] sm:$0xff]
        %v710 = vld [vmem:[%s506 + $0x20] sm:$0xff]
        %v711 = vld [vmem:[%s506 + $0x28] sm:$0xff]
        %v712 = vld [vmem:[%s506 + $0x30] sm:$0xff]
        %v713 = vld [vmem:[%s506 + $0x38] sm:$0xff]
        %v714 = vld [vmem:[%s506 + $0x40] sm:$0xff]
        %v715 = vld [vmem:[%s506 + $0x48] sm:$0xff]
        %v716 = vld [vmem:[%s506 + $0x50] sm:$0xff]
        %v717 = vld [vmem:[%s506 + $0x58] sm:$0xff]
        %v718 = vld [vmem:[%s506 + $0x60] sm:$0xff]
        %v719 = vld [vmem:[%s506 + $0x68] sm:$0xff]
        %v720 = vld [vmem:[%s506 + $0x70] sm:$0xff]
        %v721 = vld [vmem:[%s506 + $0x78] sm:$0xff]
        %v722 = vld [vmem:[%s515] sm:$0xff]
        %v723 = vld [vmem:[%s515 + $0x8] sm:$0xff]
        %v724 = vld [vmem:[%s515 + $0x10] sm:$0xff]
        %v725 = vld [vmem:[%s515 + $0x18] sm:$0xff]
        %v726 = vld [vmem:[%s515 + $0x20] sm:$0xff]
        %v727 = vld [vmem:[%s515 + $0x28] sm:$0xff]
        %v728 = vld [vmem:[%s515 + $0x30] sm:$0xff]
        %v729 = vld [vmem:[%s515 + $0x38] sm:$0xff]
        %v730 = vld [vmem:[%s515 + $0x40] sm:$0xff]
        %v731 = vld [vmem:[%s515 + $0x48] sm:$0xff]
        %v732 = vld [vmem:[%s515 + $0x50] sm:$0xff]
        %v733 = vld [vmem:[%s515 + $0x58] sm:$0xff]
        %v734 = vld [vmem:[%s515 + $0x60] sm:$0xff]
        %v735 = vld [vmem:[%s515 + $0x68] sm:$0xff]
        %v736 = vld [vmem:[%s515 + $0x70] sm:$0xff]
        %v737 = vld [vmem:[%s515 + $0x78] sm:$0xff]
        %v738 = vsub.f32 %v690, %v706
        %v739 = vsub.f32 %v691, %v707
        %v740 = vsub.f32 %v692, %v708
        %v741 = vsub.f32 %v693, %v709
        %v742 = vsub.f32 %v694, %v710
        %v743 = vsub.f32 %v695, %v711
        %v744 = vsub.f32 %v696, %v712
        %v745 = vsub.f32 %v697, %v713
        %v746 = vsub.f32 %v698, %v714
        %v747 = vsub.f32 %v699, %v715
        %v748 = vsub.f32 %v700, %v716
        %v749 = vsub.f32 %v701, %v717
        %v750 = vsub.f32 %v702, %v718
        %v751 = vsub.f32 %v703, %v719
        %v752 = vsub.f32 %v704, %v720
        %v753 = vsub.f32 %v705, %v721
        %v754 = vadd.f32 %v738, 1e-06
        %v755 = vadd.f32 %v739, 1e-06
        %v756 = vadd.f32 %v740, 1e-06
        %v757 = vadd.f32 %v741, 1e-06
        %v758 = vadd.f32 %v742, 1e-06
        %v759 = vadd.f32 %v743, 1e-06
        %v760 = vadd.f32 %v744, 1e-06
        %v761 = vadd.f32 %v745, 1e-06
        %v762 = vadd.f32 %v746, 1e-06
        %v763 = vadd.f32 %v747, 1e-06
        %v764 = vadd.f32 %v748, 1e-06
        %v765 = vadd.f32 %v749, 1e-06
        %v766 = vadd.f32 %v750, 1e-06
        %v767 = vadd.f32 %v751, 1e-06
        %v768 = vadd.f32 %v752, 1e-06
        %v769 = vadd.f32 %v753, 1e-06
        %v770 = vsub.f32 %v690, %v722
        %v771 = vsub.f32 %v691, %v723
        %v772 = vsub.f32 %v692, %v724
        %v773 = vsub.f32 %v693, %v725
        %v774 = vsub.f32 %v694, %v726
        %v775 = vsub.f32 %v695, %v727
        %v776 = vsub.f32 %v696, %v728
        %v777 = vsub.f32 %v697, %v729
        %v778 = vsub.f32 %v698, %v730
        %v779 = vsub.f32 %v699, %v731
        %v780 = vsub.f32 %v700, %v732
        %v781 = vsub.f32 %v701, %v733
        %v782 = vsub.f32 %v702, %v734
        %v783 = vsub.f32 %v703, %v735
        %v784 = vsub.f32 %v704, %v736
        %v785 = vsub.f32 %v705, %v737
        %v786 = vadd.f32 %v770, 1e-06
        %v787 = vadd.f32 %v771, 1e-06
        %v788 = vadd.f32 %v772, 1e-06
        %v789 = vadd.f32 %v773, 1e-06
        %v790 = vadd.f32 %v774, 1e-06
        %v791 = vadd.f32 %v775, 1e-06
        %v792 = vadd.f32 %v776, 1e-06
        %v793 = vadd.f32 %v777, 1e-06
        %v794 = vadd.f32 %v778, 1e-06
        %v795 = vadd.f32 %v779, 1e-06
        %v796 = vadd.f32 %v780, 1e-06
        %v797 = vadd.f32 %v781, 1e-06
        %v798 = vadd.f32 %v782, 1e-06
        %v799 = vadd.f32 %v783, 1e-06
        %v800 = vadd.f32 %v784, 1e-06
        %v801 = vadd.f32 %v785, 1e-06
        %v802 = vmul.f32 %v754, %v754
        %v803 = vmul.f32 %v755, %v755
        %v804 = vmul.f32 %v756, %v756
        %v805 = vmul.f32 %v757, %v757
        %v806 = vmul.f32 %v758, %v758
        %v807 = vmul.f32 %v759, %v759
        %v808 = vmul.f32 %v760, %v760
        %v809 = vmul.f32 %v761, %v761
        %v810 = vmul.f32 %v762, %v762
        %v811 = vmul.f32 %v763, %v763
        %v812 = vmul.f32 %v764, %v764
        %v813 = vmul.f32 %v765, %v765
        %v814 = vmul.f32 %v766, %v766
        %v815 = vmul.f32 %v767, %v767
        %v816 = vmul.f32 %v768, %v768
        %v817 = vmul.f32 %v769, %v769
        %v818 = vadd.f32 %v802, %v803
        %819 = vadd.xlane.f32.xlu0 %v818
        %v820 = vpop.xlane.xlu0 %819
        %v821 = vadd.f32 %v804, %v805
        %822 = vadd.xlane.f32.xlu0 %v821
        %v823 = vpop.xlane.xlu0 %822
        %v824 = vadd.f32 %v806, %v807
        %825 = vadd.xlane.f32.xlu0 %v824
        %v826 = vpop.xlane.xlu0 %825
        %v827 = vadd.f32 %v808, %v809
        %828 = vadd.xlane.f32.xlu0 %v827
        %v829 = vpop.xlane.xlu0 %828
        %v830 = vadd.f32 %v810, %v811
        %831 = vadd.xlane.f32.xlu0 %v830
        %v832 = vpop.xlane.xlu0 %831
        %v833 = vadd.f32 %v812, %v813
        %834 = vadd.xlane.f32.xlu0 %v833
        %v835 = vpop.xlane.xlu0 %834
        %v836 = vadd.f32 %v814, %v815
        %837 = vadd.xlane.f32.xlu0 %v836
        %v838 = vpop.xlane.xlu0 %837
        %v839 = vadd.f32 %v816, %v817
        %840 = vadd.xlane.f32.xlu0 %v839
        %v841 = vpop.xlane.xlu0 %840
        %v842 = vrsqrt.pop %v820
        %v843 = vmul.f32 %v820, %v842
        %vm844 = vcmp.eq.f32.partialorder %v820, inf
        %v845 = vsel %vm844, %v820, %v843
        %vm846 = vcmp.eq.f32.partialorder %v820, 0.0
        %v847 = vand.u32 %v820, 2147483648
        %v848 = vsel %vm846, %v847, %v845
        %v849 = vrsqrt.pop %v823
        %v850 = vmul.f32 %v823, %v849
        %vm851 = vcmp.eq.f32.partialorder %v823, inf
        %v852 = vsel %vm851, %v823, %v850
        %vm853 = vcmp.eq.f32.partialorder %v823, 0.0
        %v854 = vand.u32 %v823, 2147483648
        %v855 = vsel %vm853, %v854, %v852
        %v856 = vrsqrt.pop %v826
        %v857 = vmul.f32 %v826, %v856
        %vm858 = vcmp.eq.f32.partialorder %v826, inf
        %v859 = vsel %vm858, %v826, %v857
        %vm860 = vcmp.eq.f32.partialorder %v826, 0.0
        %v861 = vand.u32 %v826, 2147483648
        %v862 = vsel %vm860, %v861, %v859
        %v863 = vrsqrt.pop %v829
        %v864 = vmul.f32 %v829, %v863
        %vm865 = vcmp.eq.f32.partialorder %v829, inf
        %v866 = vsel %vm865, %v829, %v864
        %vm867 = vcmp.eq.f32.partialorder %v829, 0.0
        %v868 = vand.u32 %v829, 2147483648
        %v869 = vsel %vm867, %v868, %v866
        %v870 = vrsqrt.pop %v832
        %v871 = vmul.f32 %v832, %v870
        %vm872 = vcmp.eq.f32.partialorder %v832, inf
        %v873 = vsel %vm872, %v832, %v871
        %vm874 = vcmp.eq.f32.partialorder %v832, 0.0
        %v875 = vand.u32 %v832, 2147483648
        %v876 = vsel %vm874, %v875, %v873
        %v877 = vrsqrt.pop %v835
        %v878 = vmul.f32 %v835, %v877
        %vm879 = vcmp.eq.f32.partialorder %v835, inf
        %v880 = vsel %vm879, %v835, %v878
        %vm881 = vcmp.eq.f32.partialorder %v835, 0.0
        %v882 = vand.u32 %v835, 2147483648
        %v883 = vsel %vm881, %v882, %v880
        %v884 = vrsqrt.pop %v838
        %v885 = vmul.f32 %v838, %v884
        %vm886 = vcmp.eq.f32.partialorder %v838, inf
        %v887 = vsel %vm886, %v838, %v885
        %vm888 = vcmp.eq.f32.partialorder %v838, 0.0
        %v889 = vand.u32 %v838, 2147483648
        %v890 = vsel %vm888, %v889, %v887
        %v891 = vrsqrt.pop %v841
        %v892 = vmul.f32 %v841, %v891
        %vm893 = vcmp.eq.f32.partialorder %v841, inf
        %v894 = vsel %vm893, %v841, %v892
        %vm895 = vcmp.eq.f32.partialorder %v841, 0.0
        %v896 = vand.u32 %v841, 2147483648
        %v897 = vsel %vm895, %v896, %v894
        %v898 = vmul.f32 %v786, %v786
        %v899 = vmul.f32 %v787, %v787
        %v900 = vmul.f32 %v788, %v788
        %v901 = vmul.f32 %v789, %v789
        %v902 = vmul.f32 %v790, %v790
        %v903 = vmul.f32 %v791, %v791
        %v904 = vmul.f32 %v792, %v792
        %v905 = vmul.f32 %v793, %v793
        %v906 = vmul.f32 %v794, %v794
        %v907 = vmul.f32 %v795, %v795
        %v908 = vmul.f32 %v796, %v796
        %v909 = vmul.f32 %v797, %v797
        %v910 = vmul.f32 %v798, %v798
        %v911 = vmul.f32 %v799, %v799
        %v912 = vmul.f32 %v800, %v800
        %v913 = vmul.f32 %v801, %v801
        %v914 = vadd.f32 %v898, %v899
        %915 = vadd.xlane.f32.xlu0 %v914
        %v916 = vpop.xlane.xlu0 %915
        %v917 = vadd.f32 %v900, %v901
        %918 = vadd.xlane.f32.xlu0 %v917
        %v919 = vpop.xlane.xlu0 %918
        %v920 = vadd.f32 %v902, %v903
        %921 = vadd.xlane.f32.xlu0 %v920
        %v922 = vpop.xlane.xlu0 %921
        %v923 = vadd.f32 %v904, %v905
        %924 = vadd.xlane.f32.xlu0 %v923
        %v925 = vpop.xlane.xlu0 %924
        %v926 = vadd.f32 %v906, %v907
        %927 = vadd.xlane.f32.xlu0 %v926
        %v928 = vpop.xlane.xlu0 %927
        %v929 = vadd.f32 %v908, %v909
        %930 = vadd.xlane.f32.xlu0 %v929
        %v931 = vpop.xlane.xlu0 %930
        %v932 = vadd.f32 %v910, %v911
        %933 = vadd.xlane.f32.xlu0 %v932
        %v934 = vpop.xlane.xlu0 %933
        %v935 = vadd.f32 %v912, %v913
        %936 = vadd.xlane.f32.xlu0 %v935
        %v937 = vpop.xlane.xlu0 %936
        %v938 = vrsqrt.pop %v916
        %v939 = vmul.f32 %v916, %v938
        %vm940 = vcmp.eq.f32.partialorder %v916, inf
        %v941 = vsel %vm940, %v916, %v939
        %vm942 = vcmp.eq.f32.partialorder %v916, 0.0
        %v943 = vand.u32 %v916, 2147483648
        %v944 = vsel %vm942, %v943, %v941
        %v945 = vrsqrt.pop %v919
        %v946 = vmul.f32 %v919, %v945
        %vm947 = vcmp.eq.f32.partialorder %v919, inf
        %v948 = vsel %vm947, %v919, %v946
        %vm949 = vcmp.eq.f32.partialorder %v919, 0.0
        %v950 = vand.u32 %v919, 2147483648
        %v951 = vsel %vm949, %v950, %v948
        %v952 = vrsqrt.pop %v922
        %v953 = vmul.f32 %v922, %v952
        %vm954 = vcmp.eq.f32.partialorder %v922, inf
        %v955 = vsel %vm954, %v922, %v953
        %vm956 = vcmp.eq.f32.partialorder %v922, 0.0
        %v957 = vand.u32 %v922, 2147483648
        %v958 = vsel %vm956, %v957, %v955
        %v959 = vrsqrt.pop %v925
        %v960 = vmul.f32 %v925, %v959
        %vm961 = vcmp.eq.f32.partialorder %v925, inf
        %v962 = vsel %vm961, %v925, %v960
        %vm963 = vcmp.eq.f32.partialorder %v925, 0.0
        %v964 = vand.u32 %v925, 2147483648
        %v965 = vsel %vm963, %v964, %v962
        %v966 = vrsqrt.pop %v928
        %v967 = vmul.f32 %v928, %v966
        %vm968 = vcmp.eq.f32.partialorder %v928, inf
        %v969 = vsel %vm968, %v928, %v967
        %vm970 = vcmp.eq.f32.partialorder %v928, 0.0
        %v971 = vand.u32 %v928, 2147483648
        %v972 = vsel %vm970, %v971, %v969
        %v973 = vrsqrt.pop %v931
        %v974 = vmul.f32 %v931, %v973
        %vm975 = vcmp.eq.f32.partialorder %v931, inf
        %v976 = vsel %vm975, %v931, %v974
        %vm977 = vcmp.eq.f32.partialorder %v931, 0.0
        %v978 = vand.u32 %v931, 2147483648
        %v979 = vsel %vm977, %v978, %v976
        %v980 = vrsqrt.pop %v934
        %v981 = vmul.f32 %v934, %v980
        %vm982 = vcmp.eq.f32.partialorder %v934, inf
        %v983 = vsel %vm982, %v934, %v981
        %vm984 = vcmp.eq.f32.partialorder %v934, 0.0
        %v985 = vand.u32 %v934, 2147483648
        %v986 = vsel %vm984, %v985, %v983
        %v987 = vrsqrt.pop %v937
        %v988 = vmul.f32 %v937, %v987
        %vm989 = vcmp.eq.f32.partialorder %v937, inf
        %v990 = vsel %vm989, %v937, %v988
        %vm991 = vcmp.eq.f32.partialorder %v937, 0.0
        %v992 = vand.u32 %v937, 2147483648
        %v993 = vsel %vm991, %v992, %v990
        %v994 = vsub.f32 %v848, %v944
        %v995 = vsub.f32 %v855, %v951
        %v996 = vsub.f32 %v862, %v958
        %v997 = vsub.f32 %v869, %v965
        %v998 = vsub.f32 %v876, %v972
        %v999 = vsub.f32 %v883, %v979
        %v1000 = vsub.f32 %v890, %v986
        %v1001 = vsub.f32 %v897, %v993
        %v1002 = vadd.f32 %v994, 0.3
        %v1003 = vadd.f32 %v995, 0.3
        %v1004 = vadd.f32 %v996, 0.3
        %v1005 = vadd.f32 %v997, 0.3
        %v1006 = vadd.f32 %v998, 0.3
        %v1007 = vadd.f32 %v999, 0.3
        %v1008 = vadd.f32 %v1000, 0.3
        %v1009 = vadd.f32 %v1001, 0.3
        %v1010 = vmax.f32 %v1002, 0.0
        %v1011 = vmax.f32 %v1003, 0.0
        %v1012 = vmax.f32 %v1004, 0.0
        %v1013 = vmax.f32 %v1005, 0.0
        %v1014 = vmax.f32 %v1006, 0.0
        %v1015 = vmax.f32 %v1007, 0.0
        %v1016 = vmax.f32 %v1008, 0.0
        %v1017 = vmax.f32 %v1009, 0.0
        %v1018 = vsel %vm682, %v1010, 0.0
        %v1019 = vsel %vm683, %v1011, 0.0
        %v1020 = vsel %vm684, %v1012, 0.0
        %v1021 = vsel %vm685, %v1013, 0.0
        %v1022 = vsel %vm686, %v1014, 0.0
        %v1023 = vsel %vm687, %v1015, 0.0
        %v1024 = vsel %vm688, %v1016, 0.0
        %v1025 = vsel %vm689, %v1017, 0.0
        %vm1026 = vcmp.gt.f32.partialorder %v1018, 0.0
        %vm1027 = vcmp.gt.f32.partialorder %v1019, 0.0
        %vm1028 = vcmp.gt.f32.partialorder %v1020, 0.0
        %vm1029 = vcmp.gt.f32.partialorder %v1021, 0.0
        %vm1030 = vcmp.gt.f32.partialorder %v1022, 0.0
        %vm1031 = vcmp.gt.f32.partialorder %v1023, 0.0
        %vm1032 = vcmp.gt.f32.partialorder %v1024, 0.0
        %vm1033 = vcmp.gt.f32.partialorder %v1025, 0.0
        %v1034 = vsel %vm1026, 1, 0
        %v1035 = vsel %vm1027, 1, 0
        %v1036 = vsel %vm1028, 1, 0
        %v1037 = vsel %vm1029, 1, 0
        %v1038 = vsel %vm1030, 1, 0
        %v1039 = vsel %vm1031, 1, 0
        %v1040 = vsel %vm1032, 1, 0
        %v1041 = vsel %vm1033, 1, 0
        %v1042 = vcvt.s32.f32 %v1034
        %v1043 = vcvt.s32.f32 %v1035
        %v1044 = vcvt.s32.f32 %v1036
        %v1045 = vcvt.s32.f32 %v1037
        %v1046 = vcvt.s32.f32 %v1038
        %v1047 = vcvt.s32.f32 %v1039
        %v1048 = vcvt.s32.f32 %v1040
        %v1049 = vcvt.s32.f32 %v1041
        %vm1050 = vcmask 7168
        %v1051 = vsel %vm1050, %v1018, 0.0
        %v1052 = vsel %vm1050, %v1019, 0.0
        %v1053 = vadd.f32 %v1051, %v1052
        %v1054 = vsel %vm1050, %v1020, 0.0
        %v1055 = vadd.f32 %v1053, %v1054
        %v1056 = vsel %vm1050, %v1021, 0.0
        %v1057 = vadd.f32 %v1055, %v1056
        %v1058 = vsel %vm1050, %v1022, 0.0
        %v1059 = vadd.f32 %v1057, %v1058
        %v1060 = vsel %vm1050, %v1023, 0.0
        %v1061 = vadd.f32 %v1059, %v1060
        %v1062 = vsel %vm1050, %v1024, 0.0
        %v1063 = vadd.f32 %v1061, %v1062
        %v1064 = vsel %vm1050, %v1025, 0.0
        %v1065 = vadd.f32 %v1063, %v1064
        %1066 = vadd.xlane.f32.xlu0 %v1065
        %v1067 = vpop.xlane.xlu0 %1066
        %v1068 = vrot.slane %v1067, 4
        %v1069 = vadd.f32 %v1067, %v1068
        %v1070 = vrot.slane %v1069, 2
        %v1071 = vadd.f32 %v1069, %v1070
        %v1072 = vrot.slane %v1071, 1
        %v1073 = vadd.f32 %v1071, %v1072
        %s1074 = vtos %v1073
        %v1075 = vsel %vm1050, %v1042, 0.0
        %v1076 = vsel %vm1050, %v1043, 0.0
        %v1077 = vadd.f32 %v1075, %v1076
        %v1078 = vsel %vm1050, %v1044, 0.0
        %v1079 = vadd.f32 %v1077, %v1078
        %v1080 = vsel %vm1050, %v1045, 0.0
        %v1081 = vadd.f32 %v1079, %v1080
        %v1082 = vsel %vm1050, %v1046, 0.0
        %v1083 = vadd.f32 %v1081, %v1082
        %v1084 = vsel %vm1050, %v1047, 0.0
        %v1085 = vadd.f32 %v1083, %v1084
        %v1086 = vsel %vm1050, %v1048, 0.0
        %v1087 = vadd.f32 %v1085, %v1086
        %v1088 = vsel %vm1050, %v1049, 0.0
        %v1089 = vadd.f32 %v1087, %v1088
        %1090 = vadd.xlane.f32.xlu0 %v1089
        %v1091 = vpop.xlane.xlu0 %1090
        %v1092 = vrot.slane %v1091, 4
        %v1093 = vadd.f32 %v1091, %v1092
        %v1094 = vrot.slane %v1093, 2
        %v1095 = vadd.f32 %v1093, %v1094
        %v1096 = vrot.slane %v1095, 1
        %v1097 = vadd.f32 %v1095, %v1096
        %s1098 = vtos %v1097
        %vm1099 = vcmp.eq.s32.totalorder %v665, 0
        %v1100 = vstv %s1074
        %v1101 = vsel %vm1099, %v1100, 0.0
        %v1102 = vadd.f32 %v1101, 0.0
        %vm1103 = vcmp.eq.s32.totalorder %v665, 1
        %v1104 = vstv %s1098
        %v1105 = vsel %vm1103, %v1104, 0.0
        %v1106 = vadd.f32 %v1102, %v1105
        %v1107 = vld [vmem:[%s524] sm:$0xff]
        %v1108 = vld [vmem:[%s524 + $0x8] sm:$0xff]
        %v1109 = vld [vmem:[%s524 + $0x10] sm:$0xff]
        %v1110 = vld [vmem:[%s524 + $0x18] sm:$0xff]
        %v1111 = vld [vmem:[%s524 + $0x20] sm:$0xff]
        %v1112 = vld [vmem:[%s524 + $0x28] sm:$0xff]
        %v1113 = vld [vmem:[%s524 + $0x30] sm:$0xff]
        %v1114 = vld [vmem:[%s524 + $0x38] sm:$0xff]
        %v1115 = vld [vmem:[%s524 + $0x40] sm:$0xff]
        %v1116 = vld [vmem:[%s524 + $0x48] sm:$0xff]
        %v1117 = vld [vmem:[%s524 + $0x50] sm:$0xff]
        %v1118 = vld [vmem:[%s524 + $0x58] sm:$0xff]
        %v1119 = vld [vmem:[%s524 + $0x60] sm:$0xff]
        %v1120 = vld [vmem:[%s524 + $0x68] sm:$0xff]
        %v1121 = vld [vmem:[%s524 + $0x70] sm:$0xff]
        %v1122 = vld [vmem:[%s524 + $0x78] sm:$0xff]
        %v1123 = vld [vmem:[%s533] sm:$0xff]
        %v1124 = vld [vmem:[%s533 + $0x8] sm:$0xff]
        %v1125 = vld [vmem:[%s533 + $0x10] sm:$0xff]
        %v1126 = vld [vmem:[%s533 + $0x18] sm:$0xff]
        %v1127 = vld [vmem:[%s533 + $0x20] sm:$0xff]
        %v1128 = vld [vmem:[%s533 + $0x28] sm:$0xff]
        %v1129 = vld [vmem:[%s533 + $0x30] sm:$0xff]
        %v1130 = vld [vmem:[%s533 + $0x38] sm:$0xff]
        %v1131 = vld [vmem:[%s533 + $0x40] sm:$0xff]
        %v1132 = vld [vmem:[%s533 + $0x48] sm:$0xff]
        %v1133 = vld [vmem:[%s533 + $0x50] sm:$0xff]
        %v1134 = vld [vmem:[%s533 + $0x58] sm:$0xff]
        %v1135 = vld [vmem:[%s533 + $0x60] sm:$0xff]
        %v1136 = vld [vmem:[%s533 + $0x68] sm:$0xff]
        %v1137 = vld [vmem:[%s533 + $0x70] sm:$0xff]
        %v1138 = vld [vmem:[%s533 + $0x78] sm:$0xff]
        %v1139 = vld [vmem:[%s542] sm:$0xff]
        %v1140 = vld [vmem:[%s542 + $0x8] sm:$0xff]
        %v1141 = vld [vmem:[%s542 + $0x10] sm:$0xff]
        %v1142 = vld [vmem:[%s542 + $0x18] sm:$0xff]
        %v1143 = vld [vmem:[%s542 + $0x20] sm:$0xff]
        %v1144 = vld [vmem:[%s542 + $0x28] sm:$0xff]
        %v1145 = vld [vmem:[%s542 + $0x30] sm:$0xff]
        %v1146 = vld [vmem:[%s542 + $0x38] sm:$0xff]
        %v1147 = vld [vmem:[%s542 + $0x40] sm:$0xff]
        %v1148 = vld [vmem:[%s542 + $0x48] sm:$0xff]
        %v1149 = vld [vmem:[%s542 + $0x50] sm:$0xff]
        %v1150 = vld [vmem:[%s542 + $0x58] sm:$0xff]
        %v1151 = vld [vmem:[%s542 + $0x60] sm:$0xff]
        %v1152 = vld [vmem:[%s542 + $0x68] sm:$0xff]
        %v1153 = vld [vmem:[%s542 + $0x70] sm:$0xff]
        %v1154 = vld [vmem:[%s542 + $0x78] sm:$0xff]
        %v1155 = vsub.f32 %v1107, %v1123
        %v1156 = vsub.f32 %v1108, %v1124
        %v1157 = vsub.f32 %v1109, %v1125
        %v1158 = vsub.f32 %v1110, %v1126
        %v1159 = vsub.f32 %v1111, %v1127
        %v1160 = vsub.f32 %v1112, %v1128
        %v1161 = vsub.f32 %v1113, %v1129
        %v1162 = vsub.f32 %v1114, %v1130
        %v1163 = vsub.f32 %v1115, %v1131
        %v1164 = vsub.f32 %v1116, %v1132
        %v1165 = vsub.f32 %v1117, %v1133
        %v1166 = vsub.f32 %v1118, %v1134
        %v1167 = vsub.f32 %v1119, %v1135
        %v1168 = vsub.f32 %v1120, %v1136
        %v1169 = vsub.f32 %v1121, %v1137
        %v1170 = vsub.f32 %v1122, %v1138
        %v1171 = vadd.f32 %v1155, 1e-06
        %v1172 = vadd.f32 %v1156, 1e-06
        %v1173 = vadd.f32 %v1157, 1e-06
        %v1174 = vadd.f32 %v1158, 1e-06
        %v1175 = vadd.f32 %v1159, 1e-06
        %v1176 = vadd.f32 %v1160, 1e-06
        %v1177 = vadd.f32 %v1161, 1e-06
        %v1178 = vadd.f32 %v1162, 1e-06
        %v1179 = vadd.f32 %v1163, 1e-06
        %v1180 = vadd.f32 %v1164, 1e-06
        %v1181 = vadd.f32 %v1165, 1e-06
        %v1182 = vadd.f32 %v1166, 1e-06
        %v1183 = vadd.f32 %v1167, 1e-06
        %v1184 = vadd.f32 %v1168, 1e-06
        %v1185 = vadd.f32 %v1169, 1e-06
        %v1186 = vadd.f32 %v1170, 1e-06
        %v1187 = vsub.f32 %v1107, %v1139
        %v1188 = vsub.f32 %v1108, %v1140
        %v1189 = vsub.f32 %v1109, %v1141
        %v1190 = vsub.f32 %v1110, %v1142
        %v1191 = vsub.f32 %v1111, %v1143
        %v1192 = vsub.f32 %v1112, %v1144
        %v1193 = vsub.f32 %v1113, %v1145
        %v1194 = vsub.f32 %v1114, %v1146
        %v1195 = vsub.f32 %v1115, %v1147
        %v1196 = vsub.f32 %v1116, %v1148
        %v1197 = vsub.f32 %v1117, %v1149
        %v1198 = vsub.f32 %v1118, %v1150
        %v1199 = vsub.f32 %v1119, %v1151
        %v1200 = vsub.f32 %v1120, %v1152
        %v1201 = vsub.f32 %v1121, %v1153
        %v1202 = vsub.f32 %v1122, %v1154
        %v1203 = vadd.f32 %v1187, 1e-06
        %v1204 = vadd.f32 %v1188, 1e-06
        %v1205 = vadd.f32 %v1189, 1e-06
        %v1206 = vadd.f32 %v1190, 1e-06
        %v1207 = vadd.f32 %v1191, 1e-06
        %v1208 = vadd.f32 %v1192, 1e-06
        %v1209 = vadd.f32 %v1193, 1e-06
        %v1210 = vadd.f32 %v1194, 1e-06
        %v1211 = vadd.f32 %v1195, 1e-06
        %v1212 = vadd.f32 %v1196, 1e-06
        %v1213 = vadd.f32 %v1197, 1e-06
        %v1214 = vadd.f32 %v1198, 1e-06
        %v1215 = vadd.f32 %v1199, 1e-06
        %v1216 = vadd.f32 %v1200, 1e-06
        %v1217 = vadd.f32 %v1201, 1e-06
        %v1218 = vadd.f32 %v1202, 1e-06
        %v1219 = vmul.f32 %v1171, %v1171
        %v1220 = vmul.f32 %v1172, %v1172
        %v1221 = vmul.f32 %v1173, %v1173
        %v1222 = vmul.f32 %v1174, %v1174
        %v1223 = vmul.f32 %v1175, %v1175
        %v1224 = vmul.f32 %v1176, %v1176
        %v1225 = vmul.f32 %v1177, %v1177
        %v1226 = vmul.f32 %v1178, %v1178
        %v1227 = vmul.f32 %v1179, %v1179
        %v1228 = vmul.f32 %v1180, %v1180
        %v1229 = vmul.f32 %v1181, %v1181
        %v1230 = vmul.f32 %v1182, %v1182
        %v1231 = vmul.f32 %v1183, %v1183
        %v1232 = vmul.f32 %v1184, %v1184
        %v1233 = vmul.f32 %v1185, %v1185
        %v1234 = vmul.f32 %v1186, %v1186
        %v1235 = vadd.f32 %v1219, %v1220
        %1236 = vadd.xlane.f32.xlu0 %v1235
        %v1237 = vpop.xlane.xlu0 %1236
        %v1238 = vadd.f32 %v1221, %v1222
        %1239 = vadd.xlane.f32.xlu0 %v1238
        %v1240 = vpop.xlane.xlu0 %1239
        %v1241 = vadd.f32 %v1223, %v1224
        %1242 = vadd.xlane.f32.xlu0 %v1241
        %v1243 = vpop.xlane.xlu0 %1242
        %v1244 = vadd.f32 %v1225, %v1226
        %1245 = vadd.xlane.f32.xlu0 %v1244
        %v1246 = vpop.xlane.xlu0 %1245
        %v1247 = vadd.f32 %v1227, %v1228
        %1248 = vadd.xlane.f32.xlu0 %v1247
        %v1249 = vpop.xlane.xlu0 %1248
        %v1250 = vadd.f32 %v1229, %v1230
        %1251 = vadd.xlane.f32.xlu0 %v1250
        %v1252 = vpop.xlane.xlu0 %1251
        %v1253 = vadd.f32 %v1231, %v1232
        %1254 = vadd.xlane.f32.xlu0 %v1253
        %v1255 = vpop.xlane.xlu0 %1254
        %v1256 = vadd.f32 %v1233, %v1234
        %1257 = vadd.xlane.f32.xlu0 %v1256
        %v1258 = vpop.xlane.xlu0 %1257
        %v1259 = vrsqrt.pop %v1237
        %v1260 = vmul.f32 %v1237, %v1259
        %vm1261 = vcmp.eq.f32.partialorder %v1237, inf
        %v1262 = vsel %vm1261, %v1237, %v1260
        %vm1263 = vcmp.eq.f32.partialorder %v1237, 0.0
        %v1264 = vand.u32 %v1237, 2147483648
        %v1265 = vsel %vm1263, %v1264, %v1262
        %v1266 = vrsqrt.pop %v1240
        %v1267 = vmul.f32 %v1240, %v1266
        %vm1268 = vcmp.eq.f32.partialorder %v1240, inf
        %v1269 = vsel %vm1268, %v1240, %v1267
        %vm1270 = vcmp.eq.f32.partialorder %v1240, 0.0
        %v1271 = vand.u32 %v1240, 2147483648
        %v1272 = vsel %vm1270, %v1271, %v1269
        %v1273 = vrsqrt.pop %v1243
        %v1274 = vmul.f32 %v1243, %v1273
        %vm1275 = vcmp.eq.f32.partialorder %v1243, inf
        %v1276 = vsel %vm1275, %v1243, %v1274
        %vm1277 = vcmp.eq.f32.partialorder %v1243, 0.0
        %v1278 = vand.u32 %v1243, 2147483648
        %v1279 = vsel %vm1277, %v1278, %v1276
        %v1280 = vrsqrt.pop %v1246
        %v1281 = vmul.f32 %v1246, %v1280
        %vm1282 = vcmp.eq.f32.partialorder %v1246, inf
        %v1283 = vsel %vm1282, %v1246, %v1281
        %vm1284 = vcmp.eq.f32.partialorder %v1246, 0.0
        %v1285 = vand.u32 %v1246, 2147483648
        %v1286 = vsel %vm1284, %v1285, %v1283
        %v1287 = vrsqrt.pop %v1249
        %v1288 = vmul.f32 %v1249, %v1287
        %vm1289 = vcmp.eq.f32.partialorder %v1249, inf
        %v1290 = vsel %vm1289, %v1249, %v1288
        %vm1291 = vcmp.eq.f32.partialorder %v1249, 0.0
        %v1292 = vand.u32 %v1249, 2147483648
        %v1293 = vsel %vm1291, %v1292, %v1290
        %v1294 = vrsqrt.pop %v1252
        %v1295 = vmul.f32 %v1252, %v1294
        %vm1296 = vcmp.eq.f32.partialorder %v1252, inf
        %v1297 = vsel %vm1296, %v1252, %v1295
        %vm1298 = vcmp.eq.f32.partialorder %v1252, 0.0
        %v1299 = vand.u32 %v1252, 2147483648
        %v1300 = vsel %vm1298, %v1299, %v1297
        %v1301 = vrsqrt.pop %v1255
        %v1302 = vmul.f32 %v1255, %v1301
        %vm1303 = vcmp.eq.f32.partialorder %v1255, inf
        %v1304 = vsel %vm1303, %v1255, %v1302
        %vm1305 = vcmp.eq.f32.partialorder %v1255, 0.0
        %v1306 = vand.u32 %v1255, 2147483648
        %v1307 = vsel %vm1305, %v1306, %v1304
        %v1308 = vrsqrt.pop %v1258
        %v1309 = vmul.f32 %v1258, %v1308
        %vm1310 = vcmp.eq.f32.partialorder %v1258, inf
        %v1311 = vsel %vm1310, %v1258, %v1309
        %vm1312 = vcmp.eq.f32.partialorder %v1258, 0.0
        %v1313 = vand.u32 %v1258, 2147483648
        %v1314 = vsel %vm1312, %v1313, %v1311
        %v1315 = vmul.f32 %v1203, %v1203
        %v1316 = vmul.f32 %v1204, %v1204
        %v1317 = vmul.f32 %v1205, %v1205
        %v1318 = vmul.f32 %v1206, %v1206
        %v1319 = vmul.f32 %v1207, %v1207
        %v1320 = vmul.f32 %v1208, %v1208
        %v1321 = vmul.f32 %v1209, %v1209
        %v1322 = vmul.f32 %v1210, %v1210
        %v1323 = vmul.f32 %v1211, %v1211
        %v1324 = vmul.f32 %v1212, %v1212
        %v1325 = vmul.f32 %v1213, %v1213
        %v1326 = vmul.f32 %v1214, %v1214
        %v1327 = vmul.f32 %v1215, %v1215
        %v1328 = vmul.f32 %v1216, %v1216
        %v1329 = vmul.f32 %v1217, %v1217
        %v1330 = vmul.f32 %v1218, %v1218
        %v1331 = vadd.f32 %v1315, %v1316
        %1332 = vadd.xlane.f32.xlu0 %v1331
        %v1333 = vpop.xlane.xlu0 %1332
        %v1334 = vadd.f32 %v1317, %v1318
        %1335 = vadd.xlane.f32.xlu0 %v1334
        %v1336 = vpop.xlane.xlu0 %1335
        %v1337 = vadd.f32 %v1319, %v1320
        %1338 = vadd.xlane.f32.xlu0 %v1337
        %v1339 = vpop.xlane.xlu0 %1338
        %v1340 = vadd.f32 %v1321, %v1322
        %1341 = vadd.xlane.f32.xlu0 %v1340
        %v1342 = vpop.xlane.xlu0 %1341
        %v1343 = vadd.f32 %v1323, %v1324
        %1344 = vadd.xlane.f32.xlu0 %v1343
        %v1345 = vpop.xlane.xlu0 %1344
        %v1346 = vadd.f32 %v1325, %v1326
        %1347 = vadd.xlane.f32.xlu0 %v1346
        %v1348 = vpop.xlane.xlu0 %1347
        %v1349 = vadd.f32 %v1327, %v1328
        %1350 = vadd.xlane.f32.xlu0 %v1349
        %v1351 = vpop.xlane.xlu0 %1350
        %v1352 = vadd.f32 %v1329, %v1330
        %1353 = vadd.xlane.f32.xlu0 %v1352
        %v1354 = vpop.xlane.xlu0 %1353
        %v1355 = vrsqrt.pop %v1333
        %v1356 = vmul.f32 %v1333, %v1355
        %vm1357 = vcmp.eq.f32.partialorder %v1333, inf
        %v1358 = vsel %vm1357, %v1333, %v1356
        %vm1359 = vcmp.eq.f32.partialorder %v1333, 0.0
        %v1360 = vand.u32 %v1333, 2147483648
        %v1361 = vsel %vm1359, %v1360, %v1358
        %v1362 = vrsqrt.pop %v1336
        %v1363 = vmul.f32 %v1336, %v1362
        %vm1364 = vcmp.eq.f32.partialorder %v1336, inf
        %v1365 = vsel %vm1364, %v1336, %v1363
        %vm1366 = vcmp.eq.f32.partialorder %v1336, 0.0
        %v1367 = vand.u32 %v1336, 2147483648
        %v1368 = vsel %vm1366, %v1367, %v1365
        %v1369 = vrsqrt.pop %v1339
        %v1370 = vmul.f32 %v1339, %v1369
        %vm1371 = vcmp.eq.f32.partialorder %v1339, inf
        %v1372 = vsel %vm1371, %v1339, %v1370
        %vm1373 = vcmp.eq.f32.partialorder %v1339, 0.0
        %v1374 = vand.u32 %v1339, 2147483648
        %v1375 = vsel %vm1373, %v1374, %v1372
        %v1376 = vrsqrt.pop %v1342
        %v1377 = vmul.f32 %v1342, %v1376
        %vm1378 = vcmp.eq.f32.partialorder %v1342, inf
        %v1379 = vsel %vm1378, %v1342, %v1377
        %vm1380 = vcmp.eq.f32.partialorder %v1342, 0.0
        %v1381 = vand.u32 %v1342, 2147483648
        %v1382 = vsel %vm1380, %v1381, %v1379
        %v1383 = vrsqrt.pop %v1345
        %v1384 = vmul.f32 %v1345, %v1383
        %vm1385 = vcmp.eq.f32.partialorder %v1345, inf
        %v1386 = vsel %vm1385, %v1345, %v1384
        %vm1387 = vcmp.eq.f32.partialorder %v1345, 0.0
        %v1388 = vand.u32 %v1345, 2147483648
        %v1389 = vsel %vm1387, %v1388, %v1386
        %v1390 = vrsqrt.pop %v1348
        %v1391 = vmul.f32 %v1348, %v1390
        %vm1392 = vcmp.eq.f32.partialorder %v1348, inf
        %v1393 = vsel %vm1392, %v1348, %v1391
        %vm1394 = vcmp.eq.f32.partialorder %v1348, 0.0
        %v1395 = vand.u32 %v1348, 2147483648
        %v1396 = vsel %vm1394, %v1395, %v1393
        %v1397 = vrsqrt.pop %v1351
        %v1398 = vmul.f32 %v1351, %v1397
        %vm1399 = vcmp.eq.f32.partialorder %v1351, inf
        %v1400 = vsel %vm1399, %v1351, %v1398
        %vm1401 = vcmp.eq.f32.partialorder %v1351, 0.0
        %v1402 = vand.u32 %v1351, 2147483648
        %v1403 = vsel %vm1401, %v1402, %v1400
        %v1404 = vrsqrt.pop %v1354
        %v1405 = vmul.f32 %v1354, %v1404
        %vm1406 = vcmp.eq.f32.partialorder %v1354, inf
        %v1407 = vsel %vm1406, %v1354, %v1405
        %vm1408 = vcmp.eq.f32.partialorder %v1354, 0.0
        %v1409 = vand.u32 %v1354, 2147483648
        %v1410 = vsel %vm1408, %v1409, %v1407
        %v1411 = vsub.f32 %v1265, %v1361
        %v1412 = vsub.f32 %v1272, %v1368
        %v1413 = vsub.f32 %v1279, %v1375
        %v1414 = vsub.f32 %v1286, %v1382
        %v1415 = vsub.f32 %v1293, %v1389
        %v1416 = vsub.f32 %v1300, %v1396
        %v1417 = vsub.f32 %v1307, %v1403
        %v1418 = vsub.f32 %v1314, %v1410
        %v1419 = vadd.f32 %v1411, 0.3
        %v1420 = vadd.f32 %v1412, 0.3
        %v1421 = vadd.f32 %v1413, 0.3
        %v1422 = vadd.f32 %v1414, 0.3
        %v1423 = vadd.f32 %v1415, 0.3
        %v1424 = vadd.f32 %v1416, 0.3
        %v1425 = vadd.f32 %v1417, 0.3
        %v1426 = vadd.f32 %v1418, 0.3
        %v1427 = vmax.f32 %v1419, 0.0
        %v1428 = vmax.f32 %v1420, 0.0
        %v1429 = vmax.f32 %v1421, 0.0
        %v1430 = vmax.f32 %v1422, 0.0
        %v1431 = vmax.f32 %v1423, 0.0
        %v1432 = vmax.f32 %v1424, 0.0
        %v1433 = vmax.f32 %v1425, 0.0
        %v1434 = vmax.f32 %v1426, 0.0
        %v1435 = vsel %vm682, %v1427, 0.0
        %v1436 = vsel %vm683, %v1428, 0.0
        %v1437 = vsel %vm684, %v1429, 0.0
        %v1438 = vsel %vm685, %v1430, 0.0
        %v1439 = vsel %vm686, %v1431, 0.0
        %v1440 = vsel %vm687, %v1432, 0.0
        %v1441 = vsel %vm688, %v1433, 0.0
        %v1442 = vsel %vm689, %v1434, 0.0
        %vm1443 = vcmp.gt.f32.partialorder %v1435, 0.0
        %vm1444 = vcmp.gt.f32.partialorder %v1436, 0.0
        %vm1445 = vcmp.gt.f32.partialorder %v1437, 0.0
        %vm1446 = vcmp.gt.f32.partialorder %v1438, 0.0
        %vm1447 = vcmp.gt.f32.partialorder %v1439, 0.0
        %vm1448 = vcmp.gt.f32.partialorder %v1440, 0.0
        %vm1449 = vcmp.gt.f32.partialorder %v1441, 0.0
        %vm1450 = vcmp.gt.f32.partialorder %v1442, 0.0
        %v1451 = vsel %vm1443, 1, 0
        %v1452 = vsel %vm1444, 1, 0
        %v1453 = vsel %vm1445, 1, 0
        %v1454 = vsel %vm1446, 1, 0
        %v1455 = vsel %vm1447, 1, 0
        %v1456 = vsel %vm1448, 1, 0
        %v1457 = vsel %vm1449, 1, 0
        %v1458 = vsel %vm1450, 1, 0
        %v1459 = vcvt.s32.f32 %v1451
        %v1460 = vcvt.s32.f32 %v1452
        %v1461 = vcvt.s32.f32 %v1453
        %v1462 = vcvt.s32.f32 %v1454
        %v1463 = vcvt.s32.f32 %v1455
        %v1464 = vcvt.s32.f32 %v1456
        %v1465 = vcvt.s32.f32 %v1457
        %v1466 = vcvt.s32.f32 %v1458
        %v1467 = vsel %vm1050, %v1435, 0.0
        %v1468 = vsel %vm1050, %v1436, 0.0
        %v1469 = vadd.f32 %v1467, %v1468
        %v1470 = vsel %vm1050, %v1437, 0.0
        %v1471 = vadd.f32 %v1469, %v1470
        %v1472 = vsel %vm1050, %v1438, 0.0
        %v1473 = vadd.f32 %v1471, %v1472
        %v1474 = vsel %vm1050, %v1439, 0.0
        %v1475 = vadd.f32 %v1473, %v1474
        %v1476 = vsel %vm1050, %v1440, 0.0
        %v1477 = vadd.f32 %v1475, %v1476
        %v1478 = vsel %vm1050, %v1441, 0.0
        %v1479 = vadd.f32 %v1477, %v1478
        %v1480 = vsel %vm1050, %v1442, 0.0
        %v1481 = vadd.f32 %v1479, %v1480
        %1482 = vadd.xlane.f32.xlu0 %v1481
        %v1483 = vpop.xlane.xlu0 %1482
        %v1484 = vrot.slane %v1483, 4
        %v1485 = vadd.f32 %v1483, %v1484
        %v1486 = vrot.slane %v1485, 2
        %v1487 = vadd.f32 %v1485, %v1486
        %v1488 = vrot.slane %v1487, 1
        %v1489 = vadd.f32 %v1487, %v1488
        %s1490 = vtos %v1489
        %v1491 = vsel %vm1050, %v1459, 0.0
        %v1492 = vsel %vm1050, %v1460, 0.0
        %v1493 = vadd.f32 %v1491, %v1492
        %v1494 = vsel %vm1050, %v1461, 0.0
        %v1495 = vadd.f32 %v1493, %v1494
        %v1496 = vsel %vm1050, %v1462, 0.0
        %v1497 = vadd.f32 %v1495, %v1496
        %v1498 = vsel %vm1050, %v1463, 0.0
        %v1499 = vadd.f32 %v1497, %v1498
        %v1500 = vsel %vm1050, %v1464, 0.0
        %v1501 = vadd.f32 %v1499, %v1500
        %v1502 = vsel %vm1050, %v1465, 0.0
        %v1503 = vadd.f32 %v1501, %v1502
        %v1504 = vsel %vm1050, %v1466, 0.0
        %v1505 = vadd.f32 %v1503, %v1504
        %1506 = vadd.xlane.f32.xlu0 %v1505
        %v1507 = vpop.xlane.xlu0 %1506
        %v1508 = vrot.slane %v1507, 4
        %v1509 = vadd.f32 %v1507, %v1508
        %v1510 = vrot.slane %v1509, 2
        %v1511 = vadd.f32 %v1509, %v1510
        %v1512 = vrot.slane %v1511, 1
        %v1513 = vadd.f32 %v1511, %v1512
        %s1514 = vtos %v1513
        %vm1515 = vcmp.eq.s32.totalorder %v665, 2
        %v1516 = vstv %s1490
        %v1517 = vsel %vm1515, %v1516, 0.0
        %v1518 = vadd.f32 %v1106, %v1517
        %vm1519 = vcmp.eq.s32.totalorder %v665, 3
        %v1520 = vstv %s1514
        %v1521 = vsel %vm1519, %v1520, 0.0
        %v1522 = vadd.f32 %v1518, %v1521
        %v1523 = vld [vmem:[%s595] sm:$0xf]
        %v1524 = vadd.f32 %v1523, %v1522
        %1525 = vst [vmem:[%s595] sm:$0xf] %v1524
        %s1526 = sand.u32 %s256, 1
        %s1527 = scalar_lea.sflag [#allocation4], %s1526
        %s1528 = sand.u32 %s256, 1
        %s1529 = smul.addr %s1528, 4
        %s1530 = scalar_lea.vmem [#allocation13], %s1529
        // Predicated region
        $region73: #{tpu_custom_call.1} parent=43 // pred_check
          %p1531 = pneg %p266
        $region74: #{tpu_custom_call.1} parent=43 // pred_check_branch
          %1533 = sbr.rel (%p1531) target = $region76
        $region75: #{tpu_custom_call.1} parent=43 // pred_region
          %s1535 = ssub.s32 64, 64
          %1536 = vsyncadd %s1527, %s1535
          %s1537 = smul.addr %s36, 64
          %s1538 = scalar_lea.hbm %s6, %s1537
          %s1540 = sshll.u32 %s1530, 4
          %s1541 = int_to_ptr.vmem [resolvable:$true] %s1540
          %1543 = dma.vmem_to_hbm [thread:$0]  %s1541, 64, %s1538, %s1527
        $region76: #{tpu_custom_call.1} parent=43 // pred_fallthru
          _
      $region44: #{tpu_custom_call.1} parent=5 // pred_fallthru
        _
      %p1544 = scmp.le.s32.totalorder 2, %s27
      // Predicated region
      $region77: #{tpu_custom_call.1} parent=5 // pred_check
        %p1545 = pneg %p1544
      $region78: #{tpu_custom_call.1} parent=5 // pred_check_branch
        %1547 = sbr.rel (%p1545) target = $region80
      $region79: #{tpu_custom_call.1} parent=5 // pred_region
        %s1548 = ssub.s32 %s27, 2
        // Predicated region
        $region81: #{tpu_custom_call.1} parent=79 // pred_check
          %p1549 = pneg %p272
        $region82: #{tpu_custom_call.1} parent=79 // pred_check_branch
          %1551 = sbr.rel (%p1549) target = $region84
        $region83: #{tpu_custom_call.1} parent=79 // pred_region
          %s1552 = sand.u32 %s257, 1
          %s1553 = scalar_lea.sflag [#allocation4], %s1552
          %s1554 = sand.u32 %s257, 1
          %s1555 = smul.addr %s1554, 4
          %s1556 = scalar_lea.vmem [#allocation13], %s1555
          %1557 = dma.done %s1553, 64
        $region84: #{tpu_custom_call.1} parent=79 // pred_fallthru
          _
      $region80: #{tpu_custom_call.1} parent=5 // pred_fallthru
        _
    $region6: #{tpu_custom_call.1} parent=1 // loop_footer
      %s31 = sadd.s32 1, %s27
    $region7: #{tpu_custom_call.1} parent=1 // loop_footer_branch
      %26 = sbr.rel target = $region3
    $region8: #{tpu_custom_call.1} parent=1 // loop_exit
      _
    %1558 = vsyncpa [#allocation3], 1
    %s1559 = scalar_lea.sflag [#allocation3], 1
    %1560 = vsyncpa %s1559, 1
    %1561 = vsyncpa [#allocation6], 1
    %s1562 = scalar_lea.sflag [#allocation6], 1
    %1563 = vsyncpa %s1562, 1
    %1564 = vsyncpa [#allocation9], 1
    %s1565 = scalar_lea.sflag [#allocation9], 1
    %1566 = vsyncpa %s1565, 1
    %1567 = vsyncpa [#allocation12], 1
    %s1568 = scalar_lea.sflag [#allocation12], 1
    %1569 = vsyncpa %s1568, 1
    %1570 = vsyncpa [#allocation4], 1
    %s1571 = scalar_lea.sflag [#allocation4], 1
    %1572 = vsyncpa %s1571, 1

</llo_original>
